<compile_context>
chip_gen: v7x
topology: tpu7x:2x2x1
jax: 0.10.0
libtpu: 0.0.40
codegen_flags: <defaults>
</compile_context>

<pallas_src>
import functools

import jax
import jax.numpy as jnp
from jax import lax
from jax.experimental import pallas as pl
from jax.experimental.pallas import tpu as pltpu


def lstm_fc_kernel(xw0_ref,   # (T, B, 4H)  precomputed x @ W_ih0^T + b0
                   whh0_ref,  # (H, 4H)     W_hh0^T
                   w1_ref,    # (2H, 4H)    [W_ih1^T ; W_hh1^T]
                   b1_ref,    # (1, 4H)     b_ih1 + b_hh1
                   wfc_ref,   # (1, H)      fc weight row
                   bfc_ref,   # (1, 1)      fc bias
                   out_ref):  # (B, 1)
    T = xw0_ref.shape[0]
    B = xw0_ref.shape[1]
    H = whh0_ref.shape[0]

    # Hoist all loop-invariant loads out of the recurrence.
    whh0 = whh0_ref[...]
    w1 = w1_ref[...]
    b1 = b1_ref[...]

    def activate(gates):
        # Full-width activations (two EUP passes over (B, 4H)), then slice
        # i, f, g, o (PyTorch gate order).
        sig = jax.nn.sigmoid(gates)
        tnh = jnp.tanh(gates)
        i = sig[:, 0 * H:1 * H]
        f = sig[:, 1 * H:2 * H]
        g = tnh[:, 2 * H:3 * H]
        o = sig[:, 3 * H:4 * H]
        return i, f, g, o

    def step(t, carry):
        h0, c0, h1, c1 = carry

        # Layer 0: input projection was precomputed (bias folded in); only the
        # recurrent matmul sits on the serial chain.
        gates0 = xw0_ref[t] + jnp.dot(h0, whh0,
                                      preferred_element_type=jnp.float32)
        i0, f0, g0, o0 = activate(gates0)
        c0n = f0 * c0 + i0 * g0
        h0n = o0 * jnp.tanh(c0n)

        # Layer 1: single fused matmul over [h0_new, h1] @ [W_ih1^T ; W_hh1^T].
        hcat = jnp.concatenate([h0n, h1], axis=1)          # (B, 2H)
        gates1 = jnp.dot(hcat, w1,
                         preferred_element_type=jnp.float32) + b1
        i1, f1, g1, o1 = activate(gates1)
        c1n = f1 * c1 + i1 * g1
        h1n = o1 * jnp.tanh(c1n)

        return (h0n, c0n, h1n, c1n)

    zeros = jnp.zeros((B, H), jnp.float32)
    _, _, h1, _ = lax.fori_loop(0, T, step, (zeros, zeros, zeros, zeros),
                                unroll=True)

    # fc on the last top-layer hidden state: VPU multiply + lane reduction
    # (avoids an N=1 MXU pass).
    out_ref[...] = (jnp.sum(h1 * wfc_ref[...], axis=-1, keepdims=True)
                    + bfc_ref[...])


@functools.partial(jax.jit, static_argnames=("hidden_size",))
def rnn_model_forward(x, params, *, hidden_size):
    B, T, I = x.shape
    H = hidden_size
    x = x.astype(jnp.float32)

    # Precompute the layer-0 input projection for all timesteps: one batched
    # matmul replaces T tiny serial matmuls inside the recurrence.
    wih0T = params["w_ih0"].T                                    # (I, 4H)
    b0 = (params["b_ih0"] + params["b_hh0"]).reshape(1, 1, 4 * H)
    xw0 = jnp.einsum("bti,ih->tbh", x, wih0T) + b0               # (T, B, 4H)
    xw0 = xw0.astype(jnp.float32)

    whh0T = params["w_hh0"].T                                    # (H, 4H)
    w1 = jnp.concatenate([params["w_ih1"].T, params["w_hh1"].T],
                         axis=0)                                 # (2H, 4H)
    b1 = (params["b_ih1"] + params["b_hh1"]).reshape(1, 4 * H)
    wfc = params["w_fc"].reshape(1, H)                           # (1, H)
    bfc = params["b_fc"].reshape(1, 1)

    vmem = pl.BlockSpec(memory_space=pltpu.MemorySpace.VMEM)
    return pl.pallas_call(
        lstm_fc_kernel,
        out_shape=jax.ShapeDtypeStruct((B, 1), jnp.float32),
        in_specs=[vmem] * 6,
        out_specs=vmem,
    )(xw0, whh0T, w1, b1, wfc, bfc)


def reference_forward(x, params, hidden_size):
    """Pure-JAX reference mirroring PyTorch nn.LSTM (eval) + Linear."""
    B, T, I = x.shape
    H = hidden_size

    def cell(x_t, h, c, wih, whh, bih, bhh):
        gates = x_t @ wih.T + bih + h @ whh.T + bhh
        i, f, g, o = jnp.split(gates, 4, axis=1)
        c_new = jax.nn.sigmoid(f) * c + jax.nn.sigmoid(i) * jnp.tanh(g)
        h_new = jax.nn.sigmoid(o) * jnp.tanh(c_new)
        return h_new, c_new

    h0 = jnp.zeros((B, H), jnp.float32)
    c0 = jnp.zeros((B, H), jnp.float32)
    h1 = jnp.zeros((B, H), jnp.float32)
    c1 = jnp.zeros((B, H), jnp.float32)
    for t in range(T):
        h0, c0 = cell(x[:, t, :], h0, c0,
                      params["w_ih0"], params["w_hh0"],
                      params["b_ih0"], params["b_hh0"])
        h1, c1 = cell(h0, h1, c1,
                      params["w_ih1"], params["w_hh1"],
                      params["b_ih1"], params["b_hh1"])
    return h1 @ params["w_fc"].T + params["b_fc"]


def init_params(key, input_size, hidden_size):
    """Deterministic init matching PyTorch shapes (uniform ±1/sqrt(H))."""
    H = hidden_size
    k = 1.0 / jnp.sqrt(jnp.float32(H))
    keys = jax.random.split(key, 10)
    u = lambda kk, shape: jax.random.uniform(kk, shape, jnp.float32, -k, k)
    return {
        "w_ih0": u(keys[0], (4 * H, input_size)),
        "w_hh0": u(keys[1], (4 * H, H)),
        "b_ih0": u(keys[2], (4 * H,)),
        "b_hh0": u(keys[3], (4 * H,)),
        "w_ih1": u(keys[4], (4 * H, H)),
        "w_hh1": u(keys[5], (4 * H, H)),
        "b_ih1": u(keys[6], (4 * H,)),
        "b_hh1": u(keys[7], (4 * H,)),
        "w_fc":  u(keys[8], (1, H)),
        "b_fc":  u(keys[9], (1,)),
    }


if __name__ == "__main__":
    B, T, I, H = 2, 8, 1, 32   # small shapes consistent with RNNModel(input_size=1)

    root = jax.random.PRNGKey(0)
    k_x, k_p = jax.random.split(root)
    x = jax.random.normal(k_x, (B, T, I), jnp.float32)
    params = init_params(k_p, I, H)

    out = rnn_model_forward(x, params, hidden_size=H)
    out = jax.block_until_ready(out)

    ref = reference_forward(x, params, H)
    assert out.shape == (B, 1)
    assert jnp.allclose(out, ref, atol=1e-5, rtol=1e-5), (out, ref)

    print("KERNEL_OK")
</pallas_src>

<mosaic_0001>
module attributes {stable_mosaic.version = 11 : i64} {
  func.func @lstm_fc_kernel(%arg0: memref<8x2x128xf32, #tpu.memory_space<vmem>>, %arg1: memref<32x128xf32, #tpu.memory_space<vmem>>, %arg2: memref<64x128xf32, #tpu.memory_space<vmem>>, %arg3: memref<1x128xf32, #tpu.memory_space<vmem>>, %arg4: memref<1x32xf32, #tpu.memory_space<vmem>>, %arg5: memref<1x1xf32, #tpu.memory_space<vmem>>, %arg6: memref<2x1xf32, #tpu.memory_space<vmem>>) attributes {dimension_semantics = [], scalar_prefetch = 0 : i64, scratch_operands = 0 : i64, tpu.core_type = #tpu.core_type<tc>} {
    %c0 = arith.constant 0 : index
    %c0_0 = arith.constant 0 : index
    %0 = vector.load %arg1[%c0, %c0_0] : memref<32x128xf32, #tpu.memory_space<vmem>>, vector<32x128xf32>
    %c0_1 = arith.constant 0 : index
    %c0_2 = arith.constant 0 : index
    %1 = vector.load %arg2[%c0_1, %c0_2] : memref<64x128xf32, #tpu.memory_space<vmem>>, vector<64x128xf32>
    %c0_3 = arith.constant 0 : index
    %c0_4 = arith.constant 0 : index
    %2 = vector.load %arg3[%c0_3, %c0_4] : memref<1x128xf32, #tpu.memory_space<vmem>>, vector<1x128xf32>
    %cst = arith.constant 0.000000e+00 : f32
    %3 = vector.broadcast %cst : f32 to vector<2x32xf32>
    %c0_i32 = arith.constant 0 : i32
    %4 = arith.index_cast %c0_i32 : i32 to index
    %c0_5 = arith.constant 0 : index
    %c0_6 = arith.constant 0 : index
    %5 = vector.load %arg0[%4, %c0_5, %c0_6] : memref<8x2x128xf32, #tpu.memory_space<vmem>>, vector<1x2x128xf32>
    %6 = vector.shape_cast %5 : vector<1x2x128xf32> to vector<2x128xf32>
    %cst_7 = arith.constant dense<0.000000e+00> : vector<2x128xf32>
    %7 = tpu.matmul %3, %0, %cst_7 {dimension_numbers = #tpu.dot_dimension_numbers<[1], [0], [0], [1], [0, 0, 1, 1], [], []>} : vector<2x32xf32>, vector<32x128xf32>, vector<2x128xf32> -> vector<2x128xf32>
    %8 = arith.addf %6, %7 : vector<2x128xf32>
    %9 = arith.negf %8 : vector<2x128xf32>
    %10 = math.exp %9 : vector<2x128xf32>
    %cst_8 = arith.constant 1.000000e+00 : f32
    %11 = vector.broadcast %cst_8 : f32 to vector<2x128xf32>
    %12 = arith.addf %11, %10 : vector<2x128xf32>
    %13 = arith.divf %11, %12 : vector<2x128xf32>
    %14 = math.tanh %8 : vector<2x128xf32>
    %15 = vector.extract_strided_slice %13 {offsets = [0, 0], sizes = [2, 32], strides = [1, 1]} : vector<2x128xf32> to vector<2x32xf32>
    %16 = vector.extract_strided_slice %13 {offsets = [0, 32], sizes = [2, 32], strides = [1, 1]} : vector<2x128xf32> to vector<2x32xf32>
    %17 = vector.extract_strided_slice %14 {offsets = [0, 64], sizes = [2, 32], strides = [1, 1]} : vector<2x128xf32> to vector<2x32xf32>
    %18 = vector.extract_strided_slice %13 {offsets = [0, 96], sizes = [2, 32], strides = [1, 1]} : vector<2x128xf32> to vector<2x32xf32>
    %19 = arith.mulf %16, %3 : vector<2x32xf32>
    %20 = arith.mulf %15, %17 : vector<2x32xf32>
    %21 = arith.addf %19, %20 : vector<2x32xf32>
    %22 = math.tanh %21 : vector<2x32xf32>
    %23 = arith.mulf %18, %22 : vector<2x32xf32>
    %24 = tpu.concatenate %23, %3 in 1 : vector<2x32xf32>, vector<2x32xf32> -> vector<2x64xf32>
    %cst_9 = arith.constant dense<0.000000e+00> : vector<2x128xf32>
    %25 = tpu.matmul %24, %1, %cst_9 {dimension_numbers = #tpu.dot_dimension_numbers<[1], [0], [0], [1], [0, 0, 1, 1], [], []>} : vector<2x64xf32>, vector<64x128xf32>, vector<2x128xf32> -> vector<2x128xf32>
    %26 = vector.broadcast %2 : vector<1x128xf32> to vector<2x128xf32>
    %27 = arith.addf %25, %26 : vector<2x128xf32>
    %28 = arith.negf %27 : vector<2x128xf32>
    %29 = math.exp %28 : vector<2x128xf32>
    %cst_10 = arith.constant 1.000000e+00 : f32
    %30 = vector.broadcast %cst_10 : f32 to vector<2x128xf32>
    %31 = arith.addf %30, %29 : vector<2x128xf32>
    %32 = arith.divf %30, %31 : vector<2x128xf32>
    %33 = math.tanh %27 : vector<2x128xf32>
    %34 = vector.extract_strided_slice %32 {offsets = [0, 0], sizes = [2, 32], strides = [1, 1]} : vector<2x128xf32> to vector<2x32xf32>
    %35 = vector.extract_strided_slice %32 {offsets = [0, 32], sizes = [2, 32], strides = [1, 1]} : vector<2x128xf32> to vector<2x32xf32>
    %36 = vector.extract_strided_slice %33 {offsets = [0, 64], sizes = [2, 32], strides = [1, 1]} : vector<2x128xf32> to vector<2x32xf32>
    %37 = vector.extract_strided_slice %32 {offsets = [0, 96], sizes = [2, 32], strides = [1, 1]} : vector<2x128xf32> to vector<2x32xf32>
    %38 = arith.mulf %35, %3 : vector<2x32xf32>
    %39 = arith.mulf %34, %36 : vector<2x32xf32>
    %40 = arith.addf %38, %39 : vector<2x32xf32>
    %41 = math.tanh %40 : vector<2x32xf32>
    %42 = arith.mulf %37, %41 : vector<2x32xf32>
    %c1_i32 = arith.constant 1 : i32
    %43 = arith.index_cast %c1_i32 : i32 to index
    %c0_11 = arith.constant 0 : index
    %c0_12 = arith.constant 0 : index
    %44 = vector.load %arg0[%43, %c0_11, %c0_12] : memref<8x2x128xf32, #tpu.memory_space<vmem>>, vector<1x2x128xf32>
    %45 = vector.shape_cast %44 : vector<1x2x128xf32> to vector<2x128xf32>
    %cst_13 = arith.constant dense<0.000000e+00> : vector<2x128xf32>
    %46 = tpu.matmul %23, %0, %cst_13 {dimension_numbers = #tpu.dot_dimension_numbers<[1], [0], [0], [1], [0, 0, 1, 1], [], []>} : vector<2x32xf32>, vector<32x128xf32>, vector<2x128xf32> -> vector<2x128xf32>
    %47 = arith.addf %45, %46 : vector<2x128xf32>
    %48 = arith.negf %47 : vector<2x128xf32>
    %49 = math.exp %48 : vector<2x128xf32>
    %cst_14 = arith.constant 1.000000e+00 : f32
    %50 = vector.broadcast %cst_14 : f32 to vector<2x128xf32>
    %51 = arith.addf %50, %49 : vector<2x128xf32>
    %52 = arith.divf %50, %51 : vector<2x128xf32>
    %53 = math.tanh %47 : vector<2x128xf32>
    %54 = vector.extract_strided_slice %52 {offsets = [0, 0], sizes = [2, 32], strides = [1, 1]} : vector<2x128xf32> to vector<2x32xf32>
    %55 = vector.extract_strided_slice %52 {offsets = [0, 32], sizes = [2, 32], strides = [1, 1]} : vector<2x128xf32> to vector<2x32xf32>
    %56 = vector.extract_strided_slice %53 {offsets = [0, 64], sizes = [2, 32], strides = [1, 1]} : vector<2x128xf32> to vector<2x32xf32>
    %57 = vector.extract_strided_slice %52 {offsets = [0, 96], sizes = [2, 32], strides = [1, 1]} : vector<2x128xf32> to vector<2x32xf32>
    %58 = arith.mulf %55, %21 : vector<2x32xf32>
    %59 = arith.mulf %54, %56 : vector<2x32xf32>
    %60 = arith.addf %58, %59 : vector<2x32xf32>
    %61 = math.tanh %60 : vector<2x32xf32>
    %62 = arith.mulf %57, %61 : vector<2x32xf32>
    %63 = tpu.concatenate %62, %42 in 1 : vector<2x32xf32>, vector<2x32xf32> -> vector<2x64xf32>
    %cst_15 = arith.constant dense<0.000000e+00> : vector<2x128xf32>
    %64 = tpu.matmul %63, %1, %cst_15 {dimension_numbers = #tpu.dot_dimension_numbers<[1], [0], [0], [1], [0, 0, 1, 1], [], []>} : vector<2x64xf32>, vector<64x128xf32>, vector<2x128xf32> -> vector<2x128xf32>
    %65 = vector.broadcast %2 : vector<1x128xf32> to vector<2x128xf32>
    %66 = arith.addf %64, %65 : vector<2x128xf32>
    %67 = arith.negf %66 : vector<2x128xf32>
    %68 = math.exp %67 : vector<2x128xf32>
    %cst_16 = arith.constant 1.000000e+00 : f32
    %69 = vector.broadcast %cst_16 : f32 to vector<2x128xf32>
    %70 = arith.addf %69, %68 : vector<2x128xf32>
    %71 = arith.divf %69, %70 : vector<2x128xf32>
    %72 = math.tanh %66 : vector<2x128xf32>
    %73 = vector.extract_strided_slice %71 {offsets = [0, 0], sizes = [2, 32], strides = [1, 1]} : vector<2x128xf32> to vector<2x32xf32>
    %74 = vector.extract_strided_slice %71 {offsets = [0, 32], sizes = [2, 32], strides = [1, 1]} : vector<2x128xf32> to vector<2x32xf32>
    %75 = vector.extract_strided_slice %72 {offsets = [0, 64], sizes = [2, 32], strides = [1, 1]} : vector<2x128xf32> to vector<2x32xf32>
    %76 = vector.extract_strided_slice %71 {offsets = [0, 96], sizes = [2, 32], strides = [1, 1]} : vector<2x128xf32> to vector<2x32xf32>
    %77 = arith.mulf %74, %40 : vector<2x32xf32>
    %78 = arith.mulf %73, %75 : vector<2x32xf32>
    %79 = arith.addf %77, %78 : vector<2x32xf32>
    %80 = math.tanh %79 : vector<2x32xf32>
    %81 = arith.mulf %76, %80 : vector<2x32xf32>
    %c2_i32 = arith.constant 2 : i32
    %82 = arith.index_cast %c2_i32 : i32 to index
    %c0_17 = arith.constant 0 : index
    %c0_18 = arith.constant 0 : index
    %83 = vector.load %arg0[%82, %c0_17, %c0_18] : memref<8x2x128xf32, #tpu.memory_space<vmem>>, vector<1x2x128xf32>
    %84 = vector.shape_cast %83 : vector<1x2x128xf32> to vector<2x128xf32>
    %cst_19 = arith.constant dense<0.000000e+00> : vector<2x128xf32>
    %85 = tpu.matmul %62, %0, %cst_19 {dimension_numbers = #tpu.dot_dimension_numbers<[1], [0], [0], [1], [0, 0, 1, 1], [], []>} : vector<2x32xf32>, vector<32x128xf32>, vector<2x128xf32> -> vector<2x128xf32>
    %86 = arith.addf %84, %85 : vector<2x128xf32>
    %87 = arith.negf %86 : vector<2x128xf32>
    %88 = math.exp %87 : vector<2x128xf32>
    %cst_20 = arith.constant 1.000000e+00 : f32
    %89 = vector.broadcast %cst_20 : f32 to vector<2x128xf32>
    %90 = arith.addf %89, %88 : vector<2x128xf32>
    %91 = arith.divf %89, %90 : vector<2x128xf32>
    %92 = math.tanh %86 : vector<2x128xf32>
    %93 = vector.extract_strided_slice %91 {offsets = [0, 0], sizes = [2, 32], strides = [1, 1]} : vector<2x128xf32> to vector<2x32xf32>
    %94 = vector.extract_strided_slice %91 {offsets = [0, 32], sizes = [2, 32], strides = [1, 1]} : vector<2x128xf32> to vector<2x32xf32>
    %95 = vector.extract_strided_slice %92 {offsets = [0, 64], sizes = [2, 32], strides = [1, 1]} : vector<2x128xf32> to vector<2x32xf32>
    %96 = vector.extract_strided_slice %91 {offsets = [0, 96], sizes = [2, 32], strides = [1, 1]} : vector<2x128xf32> to vector<2x32xf32>
    %97 = arith.mulf %94, %60 : vector<2x32xf32>
    %98 = arith.mulf %93, %95 : vector<2x32xf32>
    %99 = arith.addf %97, %98 : vector<2x32xf32>
    %100 = math.tanh %99 : vector<2x32xf32>
    %101 = arith.mulf %96, %100 : vector<2x32xf32>
    %102 = tpu.concatenate %101, %81 in 1 : vector<2x32xf32>, vector<2x32xf32> -> vector<2x64xf32>
    %cst_21 = arith.constant dense<0.000000e+00> : vector<2x128xf32>
    %103 = tpu.matmul %102, %1, %cst_21 {dimension_numbers = #tpu.dot_dimension_numbers<[1], [0], [0], [1], [0, 0, 1, 1], [], []>} : vector<2x64xf32>, vector<64x128xf32>, vector<2x128xf32> -> vector<2x128xf32>
    %104 = vector.broadcast %2 : vector<1x128xf32> to vector<2x128xf32>
    %105 = arith.addf %103, %104 : vector<2x128xf32>
    %106 = arith.negf %105 : vector<2x128xf32>
    %107 = math.exp %106 : vector<2x128xf32>
    %cst_22 = arith.constant 1.000000e+00 : f32
    %108 = vector.broadcast %cst_22 : f32 to vector<2x128xf32>
    %109 = arith.addf %108, %107 : vector<2x128xf32>
    %110 = arith.divf %108, %109 : vector<2x128xf32>
    %111 = math.tanh %105 : vector<2x128xf32>
    %112 = vector.extract_strided_slice %110 {offsets = [0, 0], sizes = [2, 32], strides = [1, 1]} : vector<2x128xf32> to vector<2x32xf32>
    %113 = vector.extract_strided_slice %110 {offsets = [0, 32], sizes = [2, 32], strides = [1, 1]} : vector<2x128xf32> to vector<2x32xf32>
    %114 = vector.extract_strided_slice %111 {offsets = [0, 64], sizes = [2, 32], strides = [1, 1]} : vector<2x128xf32> to vector<2x32xf32>
    %115 = vector.extract_strided_slice %110 {offsets = [0, 96], sizes = [2, 32], strides = [1, 1]} : vector<2x128xf32> to vector<2x32xf32>
    %116 = arith.mulf %113, %79 : vector<2x32xf32>
    %117 = arith.mulf %112, %114 : vector<2x32xf32>
    %118 = arith.addf %116, %117 : vector<2x32xf32>
    %119 = math.tanh %118 : vector<2x32xf32>
    %120 = arith.mulf %115, %119 : vector<2x32xf32>
    %c3_i32 = arith.constant 3 : i32
    %121 = arith.index_cast %c3_i32 : i32 to index
    %c0_23 = arith.constant 0 : index
    %c0_24 = arith.constant 0 : index
    %122 = vector.load %arg0[%121, %c0_23, %c0_24] : memref<8x2x128xf32, #tpu.memory_space<vmem>>, vector<1x2x128xf32>
    %123 = vector.shape_cast %122 : vector<1x2x128xf32> to vector<2x128xf32>
    %cst_25 = arith.constant dense<0.000000e+00> : vector<2x128xf32>
    %124 = tpu.matmul %101, %0, %cst_25 {dimension_numbers = #tpu.dot_dimension_numbers<[1], [0], [0], [1], [0, 0, 1, 1], [], []>} : vector<2x32xf32>, vector<32x128xf32>, vector<2x128xf32> -> vector<2x128xf32>
    %125 = arith.addf %123, %124 : vector<2x128xf32>
    %126 = arith.negf %125 : vector<2x128xf32>
    %127 = math.exp %126 : vector<2x128xf32>
    %cst_26 = arith.constant 1.000000e+00 : f32
    %128 = vector.broadcast %cst_26 : f32 to vector<2x128xf32>
    %129 = arith.addf %128, %127 : vector<2x128xf32>
    %130 = arith.divf %128, %129 : vector<2x128xf32>
    %131 = math.tanh %125 : vector<2x128xf32>
    %132 = vector.extract_strided_slice %130 {offsets = [0, 0], sizes = [2, 32], strides = [1, 1]} : vector<2x128xf32> to vector<2x32xf32>
    %133 = vector.extract_strided_slice %130 {offsets = [0, 32], sizes = [2, 32], strides = [1, 1]} : vector<2x128xf32> to vector<2x32xf32>
    %134 = vector.extract_strided_slice %131 {offsets = [0, 64], sizes = [2, 32], strides = [1, 1]} : vector<2x128xf32> to vector<2x32xf32>
    %135 = vector.extract_strided_slice %130 {offsets = [0, 96], sizes = [2, 32], strides = [1, 1]} : vector<2x128xf32> to vector<2x32xf32>
    %136 = arith.mulf %133, %99 : vector<2x32xf32>
    %137 = arith.mulf %132, %134 : vector<2x32xf32>
    %138 = arith.addf %136, %137 : vector<2x32xf32>
    %139 = math.tanh %138 : vector<2x32xf32>
    %140 = arith.mulf %135, %139 : vector<2x32xf32>
    %141 = tpu.concatenate %140, %120 in 1 : vector<2x32xf32>, vector<2x32xf32> -> vector<2x64xf32>
    %cst_27 = arith.constant dense<0.000000e+00> : vector<2x128xf32>
    %142 = tpu.matmul %141, %1, %cst_27 {dimension_numbers = #tpu.dot_dimension_numbers<[1], [0], [0], [1], [0, 0, 1, 1], [], []>} : vector<2x64xf32>, vector<64x128xf32>, vector<2x128xf32> -> vector<2x128xf32>
    %143 = vector.broadcast %2 : vector<1x128xf32> to vector<2x128xf32>
    %144 = arith.addf %142, %143 : vector<2x128xf32>
    %145 = arith.negf %144 : vector<2x128xf32>
    %146 = math.exp %145 : vector<2x128xf32>
    %cst_28 = arith.constant 1.000000e+00 : f32
    %147 = vector.broadcast %cst_28 : f32 to vector<2x128xf32>
    %148 = arith.addf %147, %146 : vector<2x128xf32>
    %149 = arith.divf %147, %148 : vector<2x128xf32>
    %150 = math.tanh %144 : vector<2x128xf32>
    %151 = vector.extract_strided_slice %149 {offsets = [0, 0], sizes = [2, 32], strides = [1, 1]} : vector<2x128xf32> to vector<2x32xf32>
    %152 = vector.extract_strided_slice %149 {offsets = [0, 32], sizes = [2, 32], strides = [1, 1]} : vector<2x128xf32> to vector<2x32xf32>
    %153 = vector.extract_strided_slice %150 {offsets = [0, 64], sizes = [2, 32], strides = [1, 1]} : vector<2x128xf32> to vector<2x32xf32>
    %154 = vector.extract_strided_slice %149 {offsets = [0, 96], sizes = [2, 32], strides = [1, 1]} : vector<2x128xf32> to vector<2x32xf32>
    %155 = arith.mulf %152, %118 : vector<2x32xf32>
    %156 = arith.mulf %151, %153 : vector<2x32xf32>
    %157 = arith.addf %155, %156 : vector<2x32xf32>
    %158 = math.tanh %157 : vector<2x32xf32>
    %159 = arith.mulf %154, %158 : vector<2x32xf32>
    %c4_i32 = arith.constant 4 : i32
    %160 = arith.index_cast %c4_i32 : i32 to index
    %c0_29 = arith.constant 0 : index
    %c0_30 = arith.constant 0 : index
    %161 = vector.load %arg0[%160, %c0_29, %c0_30] : memref<8x2x128xf32, #tpu.memory_space<vmem>>, vector<1x2x128xf32>
    %162 = vector.shape_cast %161 : vector<1x2x128xf32> to vector<2x128xf32>
    %cst_31 = arith.constant dense<0.000000e+00> : vector<2x128xf32>
    %163 = tpu.matmul %140, %0, %cst_31 {dimension_numbers = #tpu.dot_dimension_numbers<[1], [0], [0], [1], [0, 0, 1, 1], [], []>} : vector<2x32xf32>, vector<32x128xf32>, vector<2x128xf32> -> vector<2x128xf32>
    %164 = arith.addf %162, %163 : vector<2x128xf32>
    %165 = arith.negf %164 : vector<2x128xf32>
    %166 = math.exp %165 : vector<2x128xf32>
    %cst_32 = arith.constant 1.000000e+00 : f32
    %167 = vector.broadcast %cst_32 : f32 to vector<2x128xf32>
    %168 = arith.addf %167, %166 : vector<2x128xf32>
    %169 = arith.divf %167, %168 : vector<2x128xf32>
    %170 = math.tanh %164 : vector<2x128xf32>
    %171 = vector.extract_strided_slice %169 {offsets = [0, 0], sizes = [2, 32], strides = [1, 1]} : vector<2x128xf32> to vector<2x32xf32>
    %172 = vector.extract_strided_slice %169 {offsets = [0, 32], sizes = [2, 32], strides = [1, 1]} : vector<2x128xf32> to vector<2x32xf32>
    %173 = vector.extract_strided_slice %170 {offsets = [0, 64], sizes = [2, 32], strides = [1, 1]} : vector<2x128xf32> to vector<2x32xf32>
    %174 = vector.extract_strided_slice %169 {offsets = [0, 96], sizes = [2, 32], strides = [1, 1]} : vector<2x128xf32> to vector<2x32xf32>
    %175 = arith.mulf %172, %138 : vector<2x32xf32>
    %176 = arith.mulf %171, %173 : vector<2x32xf32>
    %177 = arith.addf %175, %176 : vector<2x32xf32>
    %178 = math.tanh %177 : vector<2x32xf32>
    %179 = arith.mulf %174, %178 : vector<2x32xf32>
    %180 = tpu.concatenate %179, %159 in 1 : vector<2x32xf32>, vector<2x32xf32> -> vector<2x64xf32>
    %cst_33 = arith.constant dense<0.000000e+00> : vector<2x128xf32>
    %181 = tpu.matmul %180, %1, %cst_33 {dimension_numbers = #tpu.dot_dimension_numbers<[1], [0], [0], [1], [0, 0, 1, 1], [], []>} : vector<2x64xf32>, vector<64x128xf32>, vector<2x128xf32> -> vector<2x128xf32>
    %182 = vector.broadcast %2 : vector<1x128xf32> to vector<2x128xf32>
    %183 = arith.addf %181, %182 : vector<2x128xf32>
    %184 = arith.negf %183 : vector<2x128xf32>
    %185 = math.exp %184 : vector<2x128xf32>
    %cst_34 = arith.constant 1.000000e+00 : f32
    %186 = vector.broadcast %cst_34 : f32 to vector<2x128xf32>
    %187 = arith.addf %186, %185 : vector<2x128xf32>
    %188 = arith.divf %186, %187 : vector<2x128xf32>
    %189 = math.tanh %183 : vector<2x128xf32>
    %190 = vector.extract_strided_slice %188 {offsets = [0, 0], sizes = [2, 32], strides = [1, 1]} : vector<2x128xf32> to vector<2x32xf32>
    %191 = vector.extract_strided_slice %188 {offsets = [0, 32], sizes = [2, 32], strides = [1, 1]} : vector<2x128xf32> to vector<2x32xf32>
    %192 = vector.extract_strided_slice %189 {offsets = [0, 64], sizes = [2, 32], strides = [1, 1]} : vector<2x128xf32> to vector<2x32xf32>
    %193 = vector.extract_strided_slice %188 {offsets = [0, 96], sizes = [2, 32], strides = [1, 1]} : vector<2x128xf32> to vector<2x32xf32>
    %194 = arith.mulf %191, %157 : vector<2x32xf32>
    %195 = arith.mulf %190, %192 : vector<2x32xf32>
    %196 = arith.addf %194, %195 : vector<2x32xf32>
    %197 = math.tanh %196 : vector<2x32xf32>
    %198 = arith.mulf %193, %197 : vector<2x32xf32>
    %c5_i32 = arith.constant 5 : i32
    %199 = arith.index_cast %c5_i32 : i32 to index
    %c0_35 = arith.constant 0 : index
    %c0_36 = arith.constant 0 : index
    %200 = vector.load %arg0[%199, %c0_35, %c0_36] : memref<8x2x128xf32, #tpu.memory_space<vmem>>, vector<1x2x128xf32>
    %201 = vector.shape_cast %200 : vector<1x2x128xf32> to vector<2x128xf32>
    %cst_37 = arith.constant dense<0.000000e+00> : vector<2x128xf32>
    %202 = tpu.matmul %179, %0, %cst_37 {dimension_numbers = #tpu.dot_dimension_numbers<[1], [0], [0], [1], [0, 0, 1, 1], [], []>} : vector<2x32xf32>, vector<32x128xf32>, vector<2x128xf32> -> vector<2x128xf32>
    %203 = arith.addf %201, %202 : vector<2x128xf32>
    %204 = arith.negf %203 : vector<2x128xf32>
    %205 = math.exp %204 : vector<2x128xf32>
    %cst_38 = arith.constant 1.000000e+00 : f32
    %206 = vector.broadcast %cst_38 : f32 to vector<2x128xf32>
    %207 = arith.addf %206, %205 : vector<2x128xf32>
    %208 = arith.divf %206, %207 : vector<2x128xf32>
    %209 = math.tanh %203 : vector<2x128xf32>
    %210 = vector.extract_strided_slice %208 {offsets = [0, 0], sizes = [2, 32], strides = [1, 1]} : vector<2x128xf32> to vector<2x32xf32>
    %211 = vector.extract_strided_slice %208 {offsets = [0, 32], sizes = [2, 32], strides = [1, 1]} : vector<2x128xf32> to vector<2x32xf32>
    %212 = vector.extract_strided_slice %209 {offsets = [0, 64], sizes = [2, 32], strides = [1, 1]} : vector<2x128xf32> to vector<2x32xf32>
    %213 = vector.extract_strided_slice %208 {offsets = [0, 96], sizes = [2, 32], strides = [1, 1]} : vector<2x128xf32> to vector<2x32xf32>
    %214 = arith.mulf %211, %177 : vector<2x32xf32>
    %215 = arith.mulf %210, %212 : vector<2x32xf32>
    %216 = arith.addf %214, %215 : vector<2x32xf32>
    %217 = math.tanh %216 : vector<2x32xf32>
    %218 = arith.mulf %213, %217 : vector<2x32xf32>
    %219 = tpu.concatenate %218, %198 in 1 : vector<2x32xf32>, vector<2x32xf32> -> vector<2x64xf32>
    %cst_39 = arith.constant dense<0.000000e+00> : vector<2x128xf32>
    %220 = tpu.matmul %219, %1, %cst_39 {dimension_numbers = #tpu.dot_dimension_numbers<[1], [0], [0], [1], [0, 0, 1, 1], [], []>} : vector<2x64xf32>, vector<64x128xf32>, vector<2x128xf32> -> vector<2x128xf32>
    %221 = vector.broadcast %2 : vector<1x128xf32> to vector<2x128xf32>
    %222 = arith.addf %220, %221 : vector<2x128xf32>
    %223 = arith.negf %222 : vector<2x128xf32>
    %224 = math.exp %223 : vector<2x128xf32>
    %cst_40 = arith.constant 1.000000e+00 : f32
    %225 = vector.broadcast %cst_40 : f32 to vector<2x128xf32>
    %226 = arith.addf %225, %224 : vector<2x128xf32>
    %227 = arith.divf %225, %226 : vector<2x128xf32>
    %228 = math.tanh %222 : vector<2x128xf32>
    %229 = vector.extract_strided_slice %227 {offsets = [0, 0], sizes = [2, 32], strides = [1, 1]} : vector<2x128xf32> to vector<2x32xf32>
    %230 = vector.extract_strided_slice %227 {offsets = [0, 32], sizes = [2, 32], strides = [1, 1]} : vector<2x128xf32> to vector<2x32xf32>
    %231 = vector.extract_strided_slice %228 {offsets = [0, 64], sizes = [2, 32], strides = [1, 1]} : vector<2x128xf32> to vector<2x32xf32>
    %232 = vector.extract_strided_slice %227 {offsets = [0, 96], sizes = [2, 32], strides = [1, 1]} : vector<2x128xf32> to vector<2x32xf32>
    %233 = arith.mulf %230, %196 : vector<2x32xf32>
    %234 = arith.mulf %229, %231 : vector<2x32xf32>
    %235 = arith.addf %233, %234 : vector<2x32xf32>
    %236 = math.tanh %235 : vector<2x32xf32>
    %237 = arith.mulf %232, %236 : vector<2x32xf32>
    %c6_i32 = arith.constant 6 : i32
    %238 = arith.index_cast %c6_i32 : i32 to index
    %c0_41 = arith.constant 0 : index
    %c0_42 = arith.constant 0 : index
    %239 = vector.load %arg0[%238, %c0_41, %c0_42] : memref<8x2x128xf32, #tpu.memory_space<vmem>>, vector<1x2x128xf32>
    %240 = vector.shape_cast %239 : vector<1x2x128xf32> to vector<2x128xf32>
    %cst_43 = arith.constant dense<0.000000e+00> : vector<2x128xf32>
    %241 = tpu.matmul %218, %0, %cst_43 {dimension_numbers = #tpu.dot_dimension_numbers<[1], [0], [0], [1], [0, 0, 1, 1], [], []>} : vector<2x32xf32>, vector<32x128xf32>, vector<2x128xf32> -> vector<2x128xf32>
    %242 = arith.addf %240, %241 : vector<2x128xf32>
    %243 = arith.negf %242 : vector<2x128xf32>
    %244 = math.exp %243 : vector<2x128xf32>
    %cst_44 = arith.constant 1.000000e+00 : f32
    %245 = vector.broadcast %cst_44 : f32 to vector<2x128xf32>
    %246 = arith.addf %245, %244 : vector<2x128xf32>
    %247 = arith.divf %245, %246 : vector<2x128xf32>
    %248 = math.tanh %242 : vector<2x128xf32>
    %249 = vector.extract_strided_slice %247 {offsets = [0, 0], sizes = [2, 32], strides = [1, 1]} : vector<2x128xf32> to vector<2x32xf32>
    %250 = vector.extract_strided_slice %247 {offsets = [0, 32], sizes = [2, 32], strides = [1, 1]} : vector<2x128xf32> to vector<2x32xf32>
    %251 = vector.extract_strided_slice %248 {offsets = [0, 64], sizes = [2, 32], strides = [1, 1]} : vector<2x128xf32> to vector<2x32xf32>
    %252 = vector.extract_strided_slice %247 {offsets = [0, 96], sizes = [2, 32], strides = [1, 1]} : vector<2x128xf32> to vector<2x32xf32>
    %253 = arith.mulf %250, %216 : vector<2x32xf32>
    %254 = arith.mulf %249, %251 : vector<2x32xf32>
    %255 = arith.addf %253, %254 : vector<2x32xf32>
    %256 = math.tanh %255 : vector<2x32xf32>
    %257 = arith.mulf %252, %256 : vector<2x32xf32>
    %258 = tpu.concatenate %257, %237 in 1 : vector<2x32xf32>, vector<2x32xf32> -> vector<2x64xf32>
    %cst_45 = arith.constant dense<0.000000e+00> : vector<2x128xf32>
    %259 = tpu.matmul %258, %1, %cst_45 {dimension_numbers = #tpu.dot_dimension_numbers<[1], [0], [0], [1], [0, 0, 1, 1], [], []>} : vector<2x64xf32>, vector<64x128xf32>, vector<2x128xf32> -> vector<2x128xf32>
    %260 = vector.broadcast %2 : vector<1x128xf32> to vector<2x128xf32>
    %261 = arith.addf %259, %260 : vector<2x128xf32>
    %262 = arith.negf %261 : vector<2x128xf32>
    %263 = math.exp %262 : vector<2x128xf32>
    %cst_46 = arith.constant 1.000000e+00 : f32
    %264 = vector.broadcast %cst_46 : f32 to vector<2x128xf32>
    %265 = arith.addf %264, %263 : vector<2x128xf32>
    %266 = arith.divf %264, %265 : vector<2x128xf32>
    %267 = math.tanh %261 : vector<2x128xf32>
    %268 = vector.extract_strided_slice %266 {offsets = [0, 0], sizes = [2, 32], strides = [1, 1]} : vector<2x128xf32> to vector<2x32xf32>
    %269 = vector.extract_strided_slice %266 {offsets = [0, 32], sizes = [2, 32], strides = [1, 1]} : vector<2x128xf32> to vector<2x32xf32>
    %270 = vector.extract_strided_slice %267 {offsets = [0, 64], sizes = [2, 32], strides = [1, 1]} : vector<2x128xf32> to vector<2x32xf32>
    %271 = vector.extract_strided_slice %266 {offsets = [0, 96], sizes = [2, 32], strides = [1, 1]} : vector<2x128xf32> to vector<2x32xf32>
    %272 = arith.mulf %269, %235 : vector<2x32xf32>
    %273 = arith.mulf %268, %270 : vector<2x32xf32>
    %274 = arith.addf %272, %273 : vector<2x32xf32>
    %275 = math.tanh %274 : vector<2x32xf32>
    %276 = arith.mulf %271, %275 : vector<2x32xf32>
    %c7_i32 = arith.constant 7 : i32
    %277 = arith.index_cast %c7_i32 : i32 to index
    %c0_47 = arith.constant 0 : index
    %c0_48 = arith.constant 0 : index
    %278 = vector.load %arg0[%277, %c0_47, %c0_48] : memref<8x2x128xf32, #tpu.memory_space<vmem>>, vector<1x2x128xf32>
    %279 = vector.shape_cast %278 : vector<1x2x128xf32> to vector<2x128xf32>
    %cst_49 = arith.constant dense<0.000000e+00> : vector<2x128xf32>
    %280 = tpu.matmul %257, %0, %cst_49 {dimension_numbers = #tpu.dot_dimension_numbers<[1], [0], [0], [1], [0, 0, 1, 1], [], []>} : vector<2x32xf32>, vector<32x128xf32>, vector<2x128xf32> -> vector<2x128xf32>
    %281 = arith.addf %279, %280 : vector<2x128xf32>
    %282 = arith.negf %281 : vector<2x128xf32>
    %283 = math.exp %282 : vector<2x128xf32>
    %cst_50 = arith.constant 1.000000e+00 : f32
    %284 = vector.broadcast %cst_50 : f32 to vector<2x128xf32>
    %285 = arith.addf %284, %283 : vector<2x128xf32>
    %286 = arith.divf %284, %285 : vector<2x128xf32>
    %287 = math.tanh %281 : vector<2x128xf32>
    %288 = vector.extract_strided_slice %286 {offsets = [0, 0], sizes = [2, 32], strides = [1, 1]} : vector<2x128xf32> to vector<2x32xf32>
    %289 = vector.extract_strided_slice %286 {offsets = [0, 32], sizes = [2, 32], strides = [1, 1]} : vector<2x128xf32> to vector<2x32xf32>
    %290 = vector.extract_strided_slice %287 {offsets = [0, 64], sizes = [2, 32], strides = [1, 1]} : vector<2x128xf32> to vector<2x32xf32>
    %291 = vector.extract_strided_slice %286 {offsets = [0, 96], sizes = [2, 32], strides = [1, 1]} : vector<2x128xf32> to vector<2x32xf32>
    %292 = arith.mulf %289, %255 : vector<2x32xf32>
    %293 = arith.mulf %288, %290 : vector<2x32xf32>
    %294 = arith.addf %292, %293 : vector<2x32xf32>
    %295 = math.tanh %294 : vector<2x32xf32>
    %296 = arith.mulf %291, %295 : vector<2x32xf32>
    %297 = tpu.concatenate %296, %276 in 1 : vector<2x32xf32>, vector<2x32xf32> -> vector<2x64xf32>
    %cst_51 = arith.constant dense<0.000000e+00> : vector<2x128xf32>
    %298 = tpu.matmul %297, %1, %cst_51 {dimension_numbers = #tpu.dot_dimension_numbers<[1], [0], [0], [1], [0, 0, 1, 1], [], []>} : vector<2x64xf32>, vector<64x128xf32>, vector<2x128xf32> -> vector<2x128xf32>
    %299 = vector.broadcast %2 : vector<1x128xf32> to vector<2x128xf32>
    %300 = arith.addf %298, %299 : vector<2x128xf32>
    %301 = arith.negf %300 : vector<2x128xf32>
    %302 = math.exp %301 : vector<2x128xf32>
    %cst_52 = arith.constant 1.000000e+00 : f32
    %303 = vector.broadcast %cst_52 : f32 to vector<2x128xf32>
    %304 = arith.addf %303, %302 : vector<2x128xf32>
    %305 = arith.divf %303, %304 : vector<2x128xf32>
    %306 = math.tanh %300 : vector<2x128xf32>
    %307 = vector.extract_strided_slice %305 {offsets = [0, 0], sizes = [2, 32], strides = [1, 1]} : vector<2x128xf32> to vector<2x32xf32>
    %308 = vector.extract_strided_slice %305 {offsets = [0, 32], sizes = [2, 32], strides = [1, 1]} : vector<2x128xf32> to vector<2x32xf32>
    %309 = vector.extract_strided_slice %306 {offsets = [0, 64], sizes = [2, 32], strides = [1, 1]} : vector<2x128xf32> to vector<2x32xf32>
    %310 = vector.extract_strided_slice %305 {offsets = [0, 96], sizes = [2, 32], strides = [1, 1]} : vector<2x128xf32> to vector<2x32xf32>
    %311 = arith.mulf %308, %274 : vector<2x32xf32>
    %312 = arith.mulf %307, %309 : vector<2x32xf32>
    %313 = arith.addf %311, %312 : vector<2x32xf32>
    %314 = math.tanh %313 : vector<2x32xf32>
    %315 = arith.mulf %310, %314 : vector<2x32xf32>
    %c8_i32 = arith.constant 8 : i32
    %c0_53 = arith.constant 0 : index
    %c0_54 = arith.constant 0 : index
    %316 = vector.load %arg4[%c0_53, %c0_54] : memref<1x32xf32, #tpu.memory_space<vmem>>, vector<1x32xf32>
    %317 = vector.broadcast %316 : vector<1x32xf32> to vector<2x32xf32>
    %318 = arith.mulf %315, %317 : vector<2x32xf32>
    %cst_55 = arith.constant dense<0.000000e+00> : vector<2xf32>
    %319 = vector.multi_reduction <add>, %318, %cst_55 [1] : vector<2x32xf32> to vector<2xf32>
    %320 = vector.shape_cast %319 : vector<2xf32> to vector<2x1xf32>
    %c0_56 = arith.constant 0 : index
    %c0_57 = arith.constant 0 : index
    %321 = vector.load %arg5[%c0_56, %c0_57] : memref<1x1xf32, #tpu.memory_space<vmem>>, vector<1x1xf32>
    %322 = vector.broadcast %321 : vector<1x1xf32> to vector<2x1xf32>
    %323 = arith.addf %320, %322 : vector<2x1xf32>
    %c0_58 = arith.constant 0 : index
    %c0_59 = arith.constant 0 : index
    %324 = vector.load %arg6[%c0_58, %c0_59] : memref<2x1xf32, #tpu.memory_space<vmem>>, vector<2x1xf32>
    tpu.vector_store %arg6[%c0_58, %c0_59], %323 {strides = array<i32>} : memref<2x1xf32, #tpu.memory_space<vmem>>, vector<2x1xf32>,
    return
  }
}

</mosaic_0001>

<llo_original>
// kernel: rnn_model_forward.1
$region0: #{rnn_model_forward.1}
  #allocation0 [shape = 'u32[]', space=smem, size = 0x4, offset = 0x4, fixed_abs, tag = 'smem constant byte address 0x4 - core index']
  #allocation1 [shape = 'u32[144,128]{1,0:T(1,128)}', space=vmem, size = 0x12000, scoped, tag = 'internal scratch']
  #allocation2 [shape = 'f32[1,1]{1,0:T(1,128)S(1)}', space=vmem, size = 0x200, scoped, tag = 'scoped memory for rnn_model_forward.1']
  %s0 = inlined_call_operand.vmem [shape: f32[8,2,128], index: 0, kind: input, shape index: {}]
  %s1 = inlined_call_operand.vmem [shape: f32[32,128], index: 1, kind: input, shape index: {}]
  %s2 = inlined_call_operand.vmem [shape: f32[64,128], index: 2, kind: input, shape index: {}]
  %s3 = inlined_call_operand.vmem [shape: f32[1,128], index: 3, kind: input, shape index: {}]
  %s4 = inlined_call_operand.vmem [shape: f32[1,32], index: 4, kind: input, shape index: {}]
  %s5 = inlined_call_operand.<no memory space> [shape: f32[1,1], index: 5, kind: input, shape index: {}]
  %s6 = inlined_call_operand.vmem [shape: f32[2,1], index: 6, kind: output, shape index: {}]
  %s7 = sld [smem:[#allocation0]]
  $region34: #{rnn_model_forward.1} parent=0
    _
  %s9 = ssub.s32 1, %s7
  %s10 = scalar_select 0, %s9, %s7
  %v11 = vstv %s5
  %12 = vst [vmem:[#allocation2] sm:$0x1] %v11
  // Predicated region
  $region2: #{rnn_model_forward.1} parent=0 // pred_check
    _
  $region3: #{rnn_model_forward.1} parent=0 // pred_check_branch
    %14 = sbr.rel (0) target = $region5
  $region4: #{rnn_model_forward.1} parent=0 // pred_region
    _
  $region5: #{rnn_model_forward.1} parent=0 // pred_fallthru
    _
  // Predicated region
  $region6: #{rnn_model_forward.1} parent=0 // pred_check
    _
  $region7: #{rnn_model_forward.1} parent=0 // pred_check_branch
    %16 = sbr.rel (0) target = $region9
  $region8: #{rnn_model_forward.1} parent=0 // pred_region
    _
  $region9: #{rnn_model_forward.1} parent=0 // pred_fallthru
    _
  // Predicated region
  $region10: #{rnn_model_forward.1} parent=0 // pred_check
    _
  $region11: #{rnn_model_forward.1} parent=0 // pred_check_branch
    %18 = sbr.rel (0) target = $region13
  $region12: #{rnn_model_forward.1} parent=0 // pred_region
    _
  $region13: #{rnn_model_forward.1} parent=0 // pred_fallthru
    _
  // Predicated region
  $region14: #{rnn_model_forward.1} parent=0 // pred_check
    _
  $region15: #{rnn_model_forward.1} parent=0 // pred_check_branch
    %20 = sbr.rel (0) target = $region17
  $region16: #{rnn_model_forward.1} parent=0 // pred_region
    _
  $region17: #{rnn_model_forward.1} parent=0 // pred_fallthru
    _
  // Predicated region
  $region18: #{rnn_model_forward.1} parent=0 // pred_check
    _
  $region19: #{rnn_model_forward.1} parent=0 // pred_check_branch
    %22 = sbr.rel (0) target = $region21
  $region20: #{rnn_model_forward.1} parent=0 // pred_region
    _
  $region21: #{rnn_model_forward.1} parent=0 // pred_fallthru
    _
  // Predicated region
  $region22: #{rnn_model_forward.1} parent=0 // pred_check
    _
  $region23: #{rnn_model_forward.1} parent=0 // pred_check_branch
    %24 = sbr.rel (0) target = $region25
  $region24: #{rnn_model_forward.1} parent=0 // pred_region
    _
  $region25: #{rnn_model_forward.1} parent=0 // pred_fallthru
    _
  %v25 = vld [vmem:[%s1] sm:$0xff]
  %v26 = vld [vmem:[%s1 + $0x8] sm:$0xff]
  %v27 = vld [vmem:[%s1 + $0x10] sm:$0xff]
  %v28 = vld [vmem:[%s1 + $0x18] sm:$0xff]
  %v29 = vld [vmem:[%s2] sm:$0xff]
  %v30 = vld [vmem:[%s2 + $0x8] sm:$0xff]
  %v31 = vld [vmem:[%s2 + $0x10] sm:$0xff]
  %v32 = vld [vmem:[%s2 + $0x18] sm:$0xff]
  %v33 = vld [vmem:[%s2 + $0x20] sm:$0xff]
  %v34 = vld [vmem:[%s2 + $0x28] sm:$0xff]
  %v35 = vld [vmem:[%s2 + $0x30] sm:$0xff]
  %v36 = vld [vmem:[%s2 + $0x38] sm:$0xff]
  %v37 = vld [vmem:[%s3] sm:$0x1]
  %v38 = vld [vmem:[%s0] sm:$0x3]
  %vm39 = vcmask 261120
  %v41 = vsel %vm39, 0.0, 0
  %43 = vmatprep.subr.mxu0 0.0
  %44 = vmatpush1.msra.mxu0 %v25
  %45 = vmatprep.subr.mxu0 0.0
  %46 = vmatpush1.msra.mxu0 %v26
  %47 = vmatprep.subr.mxu0 0.0
  %48 = vmatpush1.msra.mxu0 %v27
  %49 = vmatprep.subr.mxu0 0.0
  %50 = vmatpush1.msra.mxu0 %v28
  %51 = vmatprep.subr.mxu0 0.0
  %52 = vmatpush1.msra.mxu0 0.0
  %53 = vmatprep.subr.mxu0 0.0
  %54 = vmatpush1.msra.mxu0 0.0
  %55 = vmatprep.subr.mxu0 0.0
  %56 = vmatpush1.msra.mxu0 0.0
  %57 = vmatprep.subr.mxu0 0.0
  %58 = vmatpush1.msra.mxu0 0.0
  %59 = vmatprep.subr.mxu0 0.0
  %60 = vmatpush1.msra.mxu0 0.0
  %61 = vmatprep.subr.mxu0 0.0
  %62 = vmatpush1.msra.mxu0 0.0
  %63 = vmatprep.subr.mxu0 0.0
  %64 = vmatpush1.msra.mxu0 0.0
  %65 = vmatprep.subr.mxu0 0.0
  %66 = vmatpush1.msra.mxu0 0.0
  %67 = vmatprep.subr.mxu0 0.0
  %68 = vmatpush1.msra.mxu0 0.0
  %69 = vmatprep.subr.mxu0 0.0
  %70 = vmatpush1.msra.mxu0 0.0
  %71 = vmatprep.subr.mxu0 0.0
  %72 = vmatpush1.msra.mxu0 0.0
  %73 = vmatprep.subr.mxu0 0.0
  %74 = vmatpush1.msra.mxu0 0.0
  %75 = vmatprep.subr.mxu0 0.0
  %76 = vmatpush1.msra.mxu0 0.0
  %77 = vmatprep.subr.mxu0 0.0
  %78 = vmatpush1.msra.mxu0 0.0
  %79 = vmatprep.subr.mxu0 0.0
  %80 = vmatpush1.msra.mxu0 0.0
  %81 = vmatprep.subr.mxu0 0.0
  %82 = vmatpush1.msra.mxu0 0.0
  %83 = vmatprep.subr.mxu0 0.0
  %84 = vmatpush1.msra.mxu0 0.0
  %85 = vmatprep.subr.mxu0 0.0
  %86 = vmatpush1.msra.mxu0 0.0
  %87 = vmatprep.subr.mxu0 0.0
  %88 = vmatpush1.msra.mxu0 0.0
  %89 = vmatprep.subr.mxu0 0.0
  %90 = vmatpush1.msra.mxu0 0.0
  %91 = vmatprep.subr.mxu0 0.0
  %92 = vmatpush1.msra.mxu0 0.0
  %93 = vmatprep.subr.mxu0 0.0
  %94 = vmatpush1.msra.mxu0 0.0
  %95 = vmatprep.subr.mxu0 0.0
  %96 = vmatpush1.msra.mxu0 0.0
  %97 = vmatprep.subr.mxu0 0.0
  %98 = vmatpush1.msra.mxu0 0.0
  %99 = vmatprep.subr.mxu0 0.0
  %100 = vmatpush1.msra.mxu0 0.0
  %101 = vmatprep.subr.mxu0 0.0
  %102 = vmatpush1.msra.mxu0 0.0
  %103 = vmatprep.subr.mxu0 0.0
  %104 = vmatpush1.msra.mxu0 0.0
  %105 = vmatprep.subr.mxu0 0.0
  %106 = vmatpush1.msra.mxu0 0.0
  %107 = vmatprep.mubr.f32.mxu0 0.0
  %108 = vmatmul.mubr.f32.gmra.mrb[0].mxu0 %v41
  %v109 = vpop.f32.mrb[0].mxu0
  %v110 = vadd.f32 0.0, %v109
  %v111 = vpop.f32.mrb[0].mxu0
  %112 = vdwg.mxu0
  %v113 = vadd.f32 %v38, %v110
  %v114 = vxor.u32 %v113, 2147483648
  %v115 = vmul.f32 %v114, 1.442695
  %v116 = vpow.pop %v115
  %v117 = vadd.f32 %v116, 1.0
  %v118 = vrcp.pop %v117
  %v119 = vmul.f32 1.0, %v118
  %v120 = vtanh.pop %v113
  %v121 = vmul.f32 %v119, 0.0
  %123 = vrot.lane.b32.xlu0 %v120, 64
  %v124 = vpop.permute.xlu0 %123
  %v126 = vmul.f32 %v119, %v124
  %128 = vrot.lane.b32.xlu0 %v126, 32
  %v129 = vpop.permute.xlu0 %128
  %v131 = vadd.f32 %v121, %v129
  %v132 = vtanh.pop %v131
  %134 = vrot.lane.b32.xlu0 %v132, 64
  %v135 = vpop.permute.xlu0 %134
  %v137 = vmul.f32 %v119, %v135
  %139 = vrot.lane.b32.xlu0 %v137, 32
  %v140 = vpop.permute.xlu0 %139
  %v142 = vsel %vm39, %v140, 0.0
  %v144 = vlaneseq
  %v145 = vshrl.u32 %v144, 7
  %v146 = vsub.s32 0, %v145
  %v147 = vrot.slane %v37, %v146
  %vm149 = vcmask 523264
  %v151 = vsel %vm149, %v142, 0
  %153 = vmatprep.subr.mxu0 0.0
  %154 = vmatpush1.msra.mxu0 %v29
  %155 = vmatprep.subr.mxu0 0.0
  %156 = vmatpush1.msra.mxu0 %v30
  %157 = vmatprep.subr.mxu0 0.0
  %158 = vmatpush1.msra.mxu0 %v31
  %159 = vmatprep.subr.mxu0 0.0
  %160 = vmatpush1.msra.mxu0 %v32
  %161 = vmatprep.subr.mxu0 0.0
  %162 = vmatpush1.msra.mxu0 %v33
  %163 = vmatprep.subr.mxu0 0.0
  %164 = vmatpush1.msra.mxu0 %v34
  %165 = vmatprep.subr.mxu0 0.0
  %166 = vmatpush1.msra.mxu0 %v35
  %167 = vmatprep.subr.mxu0 0.0
  %168 = vmatpush1.msra.mxu0 %v36
  %169 = vmatprep.subr.mxu0 0.0
  %170 = vmatpush1.msra.mxu0 0.0
  %171 = vmatprep.subr.mxu0 0.0
  %172 = vmatpush1.msra.mxu0 0.0
  %173 = vmatprep.subr.mxu0 0.0
  %174 = vmatpush1.msra.mxu0 0.0
  %175 = vmatprep.subr.mxu0 0.0
  %176 = vmatpush1.msra.mxu0 0.0
  %177 = vmatprep.subr.mxu0 0.0
  %178 = vmatpush1.msra.mxu0 0.0
  %179 = vmatprep.subr.mxu0 0.0
  %180 = vmatpush1.msra.mxu0 0.0
  %181 = vmatprep.subr.mxu0 0.0
  %182 = vmatpush1.msra.mxu0 0.0
  %183 = vmatprep.subr.mxu0 0.0
  %184 = vmatpush1.msra.mxu0 0.0
  %185 = vmatprep.subr.mxu0 0.0
  %186 = vmatpush1.msra.mxu0 0.0
  %187 = vmatprep.subr.mxu0 0.0
  %188 = vmatpush1.msra.mxu0 0.0
  %189 = vmatprep.subr.mxu0 0.0
  %190 = vmatpush1.msra.mxu0 0.0
  %191 = vmatprep.subr.mxu0 0.0
  %192 = vmatpush1.msra.mxu0 0.0
  %193 = vmatprep.subr.mxu0 0.0
  %194 = vmatpush1.msra.mxu0 0.0
  %195 = vmatprep.subr.mxu0 0.0
  %196 = vmatpush1.msra.mxu0 0.0
  %197 = vmatprep.subr.mxu0 0.0
  %198 = vmatpush1.msra.mxu0 0.0
  %199 = vmatprep.subr.mxu0 0.0
  %200 = vmatpush1.msra.mxu0 0.0
  %201 = vmatprep.subr.mxu0 0.0
  %202 = vmatpush1.msra.mxu0 0.0
  %203 = vmatprep.subr.mxu0 0.0
  %204 = vmatpush1.msra.mxu0 0.0
  %205 = vmatprep.subr.mxu0 0.0
  %206 = vmatpush1.msra.mxu0 0.0
  %207 = vmatprep.subr.mxu0 0.0
  %208 = vmatpush1.msra.mxu0 0.0
  %209 = vmatprep.subr.mxu0 0.0
  %210 = vmatpush1.msra.mxu0 0.0
  %211 = vmatprep.subr.mxu0 0.0
  %212 = vmatpush1.msra.mxu0 0.0
  %213 = vmatprep.subr.mxu0 0.0
  %214 = vmatpush1.msra.mxu0 0.0
  %215 = vmatprep.subr.mxu0 0.0
  %216 = vmatpush1.msra.mxu0 0.0
  %217 = vmatprep.mubr.f32.mxu0 0.0
  %218 = vmatmul.mubr.f32.gmra.mrb[0].mxu0 %v151
  %v219 = vpop.f32.mrb[0].mxu0
  %v220 = vadd.f32 %v147, %v219
  %v221 = vpop.f32.mrb[0].mxu0
  %222 = vdwg.mxu0
  %v223 = vxor.u32 %v220, 2147483648
  %v224 = vmul.f32 %v223, 1.442695
  %v225 = vpow.pop %v224
  %v226 = vadd.f32 %v225, 1.0
  %v227 = vrcp.pop %v226
  %v228 = vmul.f32 1.0, %v227
  %v229 = vtanh.pop %v220
  %v230 = vmul.f32 %v228, 0.0
  %232 = vrot.lane.b32.xlu0 %v229, 64
  %v233 = vpop.permute.xlu0 %232
  %v235 = vmul.f32 %v228, %v233
  %237 = vrot.lane.b32.xlu0 %v235, 32
  %v238 = vpop.permute.xlu0 %237
  %v240 = vadd.f32 %v230, %v238
  %v241 = vtanh.pop %v240
  %243 = vrot.lane.b32.xlu0 %v241, 64
  %v244 = vpop.permute.xlu0 %243
  %v246 = vmul.f32 %v228, %v244
  %s247 = scalar_lea.vmem %s0, 2
  %v248 = vld [vmem:[%s247] sm:$0x3]
  %v249 = vsel %vm39, %v140, 0
  %251 = vmatprep.subr.mxu0 0.0
  %252 = vmatpush1.msra.mxu0 %v25
  %253 = vmatprep.subr.mxu0 0.0
  %254 = vmatpush1.msra.mxu0 %v26
  %255 = vmatprep.subr.mxu0 0.0
  %256 = vmatpush1.msra.mxu0 %v27
  %257 = vmatprep.subr.mxu0 0.0
  %258 = vmatpush1.msra.mxu0 %v28
  %259 = vmatprep.subr.mxu0 0.0
  %260 = vmatpush1.msra.mxu0 0.0
  %261 = vmatprep.subr.mxu0 0.0
  %262 = vmatpush1.msra.mxu0 0.0
  %263 = vmatprep.subr.mxu0 0.0
  %264 = vmatpush1.msra.mxu0 0.0
  %265 = vmatprep.subr.mxu0 0.0
  %266 = vmatpush1.msra.mxu0 0.0
  %267 = vmatprep.subr.mxu0 0.0
  %268 = vmatpush1.msra.mxu0 0.0
  %269 = vmatprep.subr.mxu0 0.0
  %270 = vmatpush1.msra.mxu0 0.0
  %271 = vmatprep.subr.mxu0 0.0
  %272 = vmatpush1.msra.mxu0 0.0
  %273 = vmatprep.subr.mxu0 0.0
  %274 = vmatpush1.msra.mxu0 0.0
  %275 = vmatprep.subr.mxu0 0.0
  %276 = vmatpush1.msra.mxu0 0.0
  %277 = vmatprep.subr.mxu0 0.0
  %278 = vmatpush1.msra.mxu0 0.0
  %279 = vmatprep.subr.mxu0 0.0
  %280 = vmatpush1.msra.mxu0 0.0
  %281 = vmatprep.subr.mxu0 0.0
  %282 = vmatpush1.msra.mxu0 0.0
  %283 = vmatprep.subr.mxu0 0.0
  %284 = vmatpush1.msra.mxu0 0.0
  %285 = vmatprep.subr.mxu0 0.0
  %286 = vmatpush1.msra.mxu0 0.0
  %287 = vmatprep.subr.mxu0 0.0
  %288 = vmatpush1.msra.mxu0 0.0
  %289 = vmatprep.subr.mxu0 0.0
  %290 = vmatpush1.msra.mxu0 0.0
  %291 = vmatprep.subr.mxu0 0.0
  %292 = vmatpush1.msra.mxu0 0.0
  %293 = vmatprep.subr.mxu0 0.0
  %294 = vmatpush1.msra.mxu0 0.0
  %295 = vmatprep.subr.mxu0 0.0
  %296 = vmatpush1.msra.mxu0 0.0
  %297 = vmatprep.subr.mxu0 0.0
  %298 = vmatpush1.msra.mxu0 0.0
  %299 = vmatprep.subr.mxu0 0.0
  %300 = vmatpush1.msra.mxu0 0.0
  %301 = vmatprep.subr.mxu0 0.0
  %302 = vmatpush1.msra.mxu0 0.0
  %303 = vmatprep.subr.mxu0 0.0
  %304 = vmatpush1.msra.mxu0 0.0
  %305 = vmatprep.subr.mxu0 0.0
  %306 = vmatpush1.msra.mxu0 0.0
  %307 = vmatprep.subr.mxu0 0.0
  %308 = vmatpush1.msra.mxu0 0.0
  %309 = vmatprep.subr.mxu0 0.0
  %310 = vmatpush1.msra.mxu0 0.0
  %311 = vmatprep.subr.mxu0 0.0
  %312 = vmatpush1.msra.mxu0 0.0
  %313 = vmatprep.subr.mxu0 0.0
  %314 = vmatpush1.msra.mxu0 0.0
  %315 = vmatprep.mubr.f32.mxu0 0.0
  %316 = vmatmul.mubr.f32.gmra.mrb[0].mxu0 %v249
  %v317 = vpop.f32.mrb[0].mxu0
  %v318 = vadd.f32 0.0, %v317
  %v319 = vpop.f32.mrb[0].mxu0
  %320 = vdwg.mxu0
  %v321 = vadd.f32 %v248, %v318
  %v322 = vxor.u32 %v321, 2147483648
  %v323 = vmul.f32 %v322, 1.442695
  %v324 = vpow.pop %v323
  %v325 = vadd.f32 %v324, 1.0
  %v326 = vrcp.pop %v325
  %v327 = vmul.f32 1.0, %v326
  %v328 = vtanh.pop %v321
  %v329 = vmul.f32 %v327, %v131
  %331 = vrot.lane.b32.xlu0 %v328, 64
  %v332 = vpop.permute.xlu0 %331
  %v334 = vmul.f32 %v327, %v332
  %336 = vrot.lane.b32.xlu0 %v334, 32
  %v337 = vpop.permute.xlu0 %336
  %v339 = vadd.f32 %v329, %v337
  %v340 = vtanh.pop %v339
  %342 = vrot.lane.b32.xlu0 %v340, 64
  %v343 = vpop.permute.xlu0 %342
  %v345 = vmul.f32 %v327, %v343
  %347 = vrot.lane.b32.xlu0 %v345, 32
  %v348 = vpop.permute.xlu0 %347
  %351 = vrot.lane.b32.xlu0 %v246, 64
  %v352 = vpop.permute.xlu0 %351
  %v354 = vsel %vm39, %v348, %v352
  %v356 = vsel %vm149, %v354, 0
  %358 = vmatprep.subr.mxu0 0.0
  %359 = vmatpush1.msra.mxu0 %v29
  %360 = vmatprep.subr.mxu0 0.0
  %361 = vmatpush1.msra.mxu0 %v30
  %362 = vmatprep.subr.mxu0 0.0
  %363 = vmatpush1.msra.mxu0 %v31
  %364 = vmatprep.subr.mxu0 0.0
  %365 = vmatpush1.msra.mxu0 %v32
  %366 = vmatprep.subr.mxu0 0.0
  %367 = vmatpush1.msra.mxu0 %v33
  %368 = vmatprep.subr.mxu0 0.0
  %369 = vmatpush1.msra.mxu0 %v34
  %370 = vmatprep.subr.mxu0 0.0
  %371 = vmatpush1.msra.mxu0 %v35
  %372 = vmatprep.subr.mxu0 0.0
  %373 = vmatpush1.msra.mxu0 %v36
  %374 = vmatprep.subr.mxu0 0.0
  %375 = vmatpush1.msra.mxu0 0.0
  %376 = vmatprep.subr.mxu0 0.0
  %377 = vmatpush1.msra.mxu0 0.0
  %378 = vmatprep.subr.mxu0 0.0
  %379 = vmatpush1.msra.mxu0 0.0
  %380 = vmatprep.subr.mxu0 0.0
  %381 = vmatpush1.msra.mxu0 0.0
  %382 = vmatprep.subr.mxu0 0.0
  %383 = vmatpush1.msra.mxu0 0.0
  %384 = vmatprep.subr.mxu0 0.0
  %385 = vmatpush1.msra.mxu0 0.0
  %386 = vmatprep.subr.mxu0 0.0
  %387 = vmatpush1.msra.mxu0 0.0
  %388 = vmatprep.subr.mxu0 0.0
  %389 = vmatpush1.msra.mxu0 0.0
  %390 = vmatprep.subr.mxu0 0.0
  %391 = vmatpush1.msra.mxu0 0.0
  %392 = vmatprep.subr.mxu0 0.0
  %393 = vmatpush1.msra.mxu0 0.0
  %394 = vmatprep.subr.mxu0 0.0
  %395 = vmatpush1.msra.mxu0 0.0
  %396 = vmatprep.subr.mxu0 0.0
  %397 = vmatpush1.msra.mxu0 0.0
  %398 = vmatprep.subr.mxu0 0.0
  %399 = vmatpush1.msra.mxu0 0.0
  %400 = vmatprep.subr.mxu0 0.0
  %401 = vmatpush1.msra.mxu0 0.0
  %402 = vmatprep.subr.mxu0 0.0
  %403 = vmatpush1.msra.mxu0 0.0
  %404 = vmatprep.subr.mxu0 0.0
  %405 = vmatpush1.msra.mxu0 0.0
  %406 = vmatprep.subr.mxu0 0.0
  %407 = vmatpush1.msra.mxu0 0.0
  %408 = vmatprep.subr.mxu0 0.0
  %409 = vmatpush1.msra.mxu0 0.0
  %410 = vmatprep.subr.mxu0 0.0
  %411 = vmatpush1.msra.mxu0 0.0
  %412 = vmatprep.subr.mxu0 0.0
  %413 = vmatpush1.msra.mxu0 0.0
  %414 = vmatprep.subr.mxu0 0.0
  %415 = vmatpush1.msra.mxu0 0.0
  %416 = vmatprep.subr.mxu0 0.0
  %417 = vmatpush1.msra.mxu0 0.0
  %418 = vmatprep.subr.mxu0 0.0
  %419 = vmatpush1.msra.mxu0 0.0
  %420 = vmatprep.subr.mxu0 0.0
  %421 = vmatpush1.msra.mxu0 0.0
  %422 = vmatprep.mubr.f32.mxu0 0.0
  %423 = vmatmul.mubr.f32.gmra.mrb[0].mxu0 %v356
  %v424 = vpop.f32.mrb[0].mxu0
  %v425 = vadd.f32 %v147, %v424
  %v426 = vpop.f32.mrb[0].mxu0
  %427 = vdwg.mxu0
  %v428 = vxor.u32 %v425, 2147483648
  %v429 = vmul.f32 %v428, 1.442695
  %v430 = vpow.pop %v429
  %v431 = vadd.f32 %v430, 1.0
  %v432 = vrcp.pop %v431
  %v433 = vmul.f32 1.0, %v432
  %v434 = vtanh.pop %v425
  %v435 = vmul.f32 %v433, %v240
  %437 = vrot.lane.b32.xlu0 %v434, 64
  %v438 = vpop.permute.xlu0 %437
  %v440 = vmul.f32 %v433, %v438
  %442 = vrot.lane.b32.xlu0 %v440, 32
  %v443 = vpop.permute.xlu0 %442
  %v445 = vadd.f32 %v435, %v443
  %v446 = vtanh.pop %v445
  %448 = vrot.lane.b32.xlu0 %v446, 64
  %v449 = vpop.permute.xlu0 %448
  %v451 = vmul.f32 %v433, %v449
  %s452 = scalar_lea.vmem %s0, 4
  %v453 = vld [vmem:[%s452] sm:$0x3]
  %v454 = vsel %vm39, %v348, 0
  %456 = vmatprep.subr.mxu0 0.0
  %457 = vmatpush1.msra.mxu0 %v25
  %458 = vmatprep.subr.mxu0 0.0
  %459 = vmatpush1.msra.mxu0 %v26
  %460 = vmatprep.subr.mxu0 0.0
  %461 = vmatpush1.msra.mxu0 %v27
  %462 = vmatprep.subr.mxu0 0.0
  %463 = vmatpush1.msra.mxu0 %v28
  %464 = vmatprep.subr.mxu0 0.0
  %465 = vmatpush1.msra.mxu0 0.0
  %466 = vmatprep.subr.mxu0 0.0
  %467 = vmatpush1.msra.mxu0 0.0
  %468 = vmatprep.subr.mxu0 0.0
  %469 = vmatpush1.msra.mxu0 0.0
  %470 = vmatprep.subr.mxu0 0.0
  %471 = vmatpush1.msra.mxu0 0.0
  %472 = vmatprep.subr.mxu0 0.0
  %473 = vmatpush1.msra.mxu0 0.0
  %474 = vmatprep.subr.mxu0 0.0
  %475 = vmatpush1.msra.mxu0 0.0
  %476 = vmatprep.subr.mxu0 0.0
  %477 = vmatpush1.msra.mxu0 0.0
  %478 = vmatprep.subr.mxu0 0.0
  %479 = vmatpush1.msra.mxu0 0.0
  %480 = vmatprep.subr.mxu0 0.0
  %481 = vmatpush1.msra.mxu0 0.0
  %482 = vmatprep.subr.mxu0 0.0
  %483 = vmatpush1.msra.mxu0 0.0
  %484 = vmatprep.subr.mxu0 0.0
  %485 = vmatpush1.msra.mxu0 0.0
  %486 = vmatprep.subr.mxu0 0.0
  %487 = vmatpush1.msra.mxu0 0.0
  %488 = vmatprep.subr.mxu0 0.0
  %489 = vmatpush1.msra.mxu0 0.0
  %490 = vmatprep.subr.mxu0 0.0
  %491 = vmatpush1.msra.mxu0 0.0
  %492 = vmatprep.subr.mxu0 0.0
  %493 = vmatpush1.msra.mxu0 0.0
  %494 = vmatprep.subr.mxu0 0.0
  %495 = vmatpush1.msra.mxu0 0.0
  %496 = vmatprep.subr.mxu0 0.0
  %497 = vmatpush1.msra.mxu0 0.0
  %498 = vmatprep.subr.mxu0 0.0
  %499 = vmatpush1.msra.mxu0 0.0
  %500 = vmatprep.subr.mxu0 0.0
  %501 = vmatpush1.msra.mxu0 0.0
  %502 = vmatprep.subr.mxu0 0.0
  %503 = vmatpush1.msra.mxu0 0.0
  %504 = vmatprep.subr.mxu0 0.0
  %505 = vmatpush1.msra.mxu0 0.0
  %506 = vmatprep.subr.mxu0 0.0
  %507 = vmatpush1.msra.mxu0 0.0
  %508 = vmatprep.subr.mxu0 0.0
  %509 = vmatpush1.msra.mxu0 0.0
  %510 = vmatprep.subr.mxu0 0.0
  %511 = vmatpush1.msra.mxu0 0.0
  %512 = vmatprep.subr.mxu0 0.0
  %513 = vmatpush1.msra.mxu0 0.0
  %514 = vmatprep.subr.mxu0 0.0
  %515 = vmatpush1.msra.mxu0 0.0
  %516 = vmatprep.subr.mxu0 0.0
  %517 = vmatpush1.msra.mxu0 0.0
  %518 = vmatprep.subr.mxu0 0.0
  %519 = vmatpush1.msra.mxu0 0.0
  %520 = vmatprep.mubr.f32.mxu0 0.0
  %521 = vmatmul.mubr.f32.gmra.mrb[0].mxu0 %v454
  %v522 = vpop.f32.mrb[0].mxu0
  %v523 = vadd.f32 0.0, %v522
  %v524 = vpop.f32.mrb[0].mxu0
  %525 = vdwg.mxu0
  %v526 = vadd.f32 %v453, %v523
  %v527 = vxor.u32 %v526, 2147483648
  %v528 = vmul.f32 %v527, 1.442695
  %v529 = vpow.pop %v528
  %v530 = vadd.f32 %v529, 1.0
  %v531 = vrcp.pop %v530
  %v532 = vmul.f32 1.0, %v531
  %v533 = vtanh.pop %v526
  %v534 = vmul.f32 %v532, %v339
  %536 = vrot.lane.b32.xlu0 %v533, 64
  %v537 = vpop.permute.xlu0 %536
  %v539 = vmul.f32 %v532, %v537
  %541 = vrot.lane.b32.xlu0 %v539, 32
  %v542 = vpop.permute.xlu0 %541
  %v544 = vadd.f32 %v534, %v542
  %v545 = vtanh.pop %v544
  %547 = vrot.lane.b32.xlu0 %v545, 64
  %v548 = vpop.permute.xlu0 %547
  %v550 = vmul.f32 %v532, %v548
  %552 = vrot.lane.b32.xlu0 %v550, 32
  %v553 = vpop.permute.xlu0 %552
  %556 = vrot.lane.b32.xlu0 %v451, 64
  %v557 = vpop.permute.xlu0 %556
  %v559 = vsel %vm39, %v553, %v557
  %v561 = vsel %vm149, %v559, 0
  %563 = vmatprep.subr.mxu0 0.0
  %564 = vmatpush1.msra.mxu0 %v29
  %565 = vmatprep.subr.mxu0 0.0
  %566 = vmatpush1.msra.mxu0 %v30
  %567 = vmatprep.subr.mxu0 0.0
  %568 = vmatpush1.msra.mxu0 %v31
  %569 = vmatprep.subr.mxu0 0.0
  %570 = vmatpush1.msra.mxu0 %v32
  %571 = vmatprep.subr.mxu0 0.0
  %572 = vmatpush1.msra.mxu0 %v33
  %573 = vmatprep.subr.mxu0 0.0
  %574 = vmatpush1.msra.mxu0 %v34
  %575 = vmatprep.subr.mxu0 0.0
  %576 = vmatpush1.msra.mxu0 %v35
  %577 = vmatprep.subr.mxu0 0.0
  %578 = vmatpush1.msra.mxu0 %v36
  %579 = vmatprep.subr.mxu0 0.0
  %580 = vmatpush1.msra.mxu0 0.0
  %581 = vmatprep.subr.mxu0 0.0
  %582 = vmatpush1.msra.mxu0 0.0
  %583 = vmatprep.subr.mxu0 0.0
  %584 = vmatpush1.msra.mxu0 0.0
  %585 = vmatprep.subr.mxu0 0.0
  %586 = vmatpush1.msra.mxu0 0.0
  %587 = vmatprep.subr.mxu0 0.0
  %588 = vmatpush1.msra.mxu0 0.0
  %589 = vmatprep.subr.mxu0 0.0
  %590 = vmatpush1.msra.mxu0 0.0
  %591 = vmatprep.subr.mxu0 0.0
  %592 = vmatpush1.msra.mxu0 0.0
  %593 = vmatprep.subr.mxu0 0.0
  %594 = vmatpush1.msra.mxu0 0.0
  %595 = vmatprep.subr.mxu0 0.0
  %596 = vmatpush1.msra.mxu0 0.0
  %597 = vmatprep.subr.mxu0 0.0
  %598 = vmatpush1.msra.mxu0 0.0
  %599 = vmatprep.subr.mxu0 0.0
  %600 = vmatpush1.msra.mxu0 0.0
  %601 = vmatprep.subr.mxu0 0.0
  %602 = vmatpush1.msra.mxu0 0.0
  %603 = vmatprep.subr.mxu0 0.0
  %604 = vmatpush1.msra.mxu0 0.0
  %605 = vmatprep.subr.mxu0 0.0
  %606 = vmatpush1.msra.mxu0 0.0
  %607 = vmatprep.subr.mxu0 0.0
  %608 = vmatpush1.msra.mxu0 0.0
  %609 = vmatprep.subr.mxu0 0.0
  %610 = vmatpush1.msra.mxu0 0.0
  %611 = vmatprep.subr.mxu0 0.0
  %612 = vmatpush1.msra.mxu0 0.0
  %613 = vmatprep.subr.mxu0 0.0
  %614 = vmatpush1.msra.mxu0 0.0
  %615 = vmatprep.subr.mxu0 0.0
  %616 = vmatpush1.msra.mxu0 0.0
  %617 = vmatprep.subr.mxu0 0.0
  %618 = vmatpush1.msra.mxu0 0.0
  %619 = vmatprep.subr.mxu0 0.0
  %620 = vmatpush1.msra.mxu0 0.0
  %621 = vmatprep.subr.mxu0 0.0
  %622 = vmatpush1.msra.mxu0 0.0
  %623 = vmatprep.subr.mxu0 0.0
  %624 = vmatpush1.msra.mxu0 0.0
  %625 = vmatprep.subr.mxu0 0.0
  %626 = vmatpush1.msra.mxu0 0.0
  %627 = vmatprep.mubr.f32.mxu0 0.0
  %628 = vmatmul.mubr.f32.gmra.mrb[0].mxu0 %v561
  %v629 = vpop.f32.mrb[0].mxu0
  %v630 = vadd.f32 %v147, %v629
  %v631 = vpop.f32.mrb[0].mxu0
  %632 = vdwg.mxu0
  %v633 = vxor.u32 %v630, 2147483648
  %v634 = vmul.f32 %v633, 1.442695
  %v635 = vpow.pop %v634
  %v636 = vadd.f32 %v635, 1.0
  %v637 = vrcp.pop %v636
  %v638 = vmul.f32 1.0, %v637
  %v639 = vtanh.pop %v630
  %v640 = vmul.f32 %v638, %v445
  %642 = vrot.lane.b32.xlu0 %v639, 64
  %v643 = vpop.permute.xlu0 %642
  %v645 = vmul.f32 %v638, %v643
  %647 = vrot.lane.b32.xlu0 %v645, 32
  %v648 = vpop.permute.xlu0 %647
  %v650 = vadd.f32 %v640, %v648
  %v651 = vtanh.pop %v650
  %653 = vrot.lane.b32.xlu0 %v651, 64
  %v654 = vpop.permute.xlu0 %653
  %v656 = vmul.f32 %v638, %v654
  %s657 = scalar_lea.vmem %s0, 6
  %v658 = vld [vmem:[%s657] sm:$0x3]
  %v659 = vsel %vm39, %v553, 0
  %661 = vmatprep.subr.mxu0 0.0
  %662 = vmatpush1.msra.mxu0 %v25
  %663 = vmatprep.subr.mxu0 0.0
  %664 = vmatpush1.msra.mxu0 %v26
  %665 = vmatprep.subr.mxu0 0.0
  %666 = vmatpush1.msra.mxu0 %v27
  %667 = vmatprep.subr.mxu0 0.0
  %668 = vmatpush1.msra.mxu0 %v28
  %669 = vmatprep.subr.mxu0 0.0
  %670 = vmatpush1.msra.mxu0 0.0
  %671 = vmatprep.subr.mxu0 0.0
  %672 = vmatpush1.msra.mxu0 0.0
  %673 = vmatprep.subr.mxu0 0.0
  %674 = vmatpush1.msra.mxu0 0.0
  %675 = vmatprep.subr.mxu0 0.0
  %676 = vmatpush1.msra.mxu0 0.0
  %677 = vmatprep.subr.mxu0 0.0
  %678 = vmatpush1.msra.mxu0 0.0
  %679 = vmatprep.subr.mxu0 0.0
  %680 = vmatpush1.msra.mxu0 0.0
  %681 = vmatprep.subr.mxu0 0.0
  %682 = vmatpush1.msra.mxu0 0.0
  %683 = vmatprep.subr.mxu0 0.0
  %684 = vmatpush1.msra.mxu0 0.0
  %685 = vmatprep.subr.mxu0 0.0
  %686 = vmatpush1.msra.mxu0 0.0
  %687 = vmatprep.subr.mxu0 0.0
  %688 = vmatpush1.msra.mxu0 0.0
  %689 = vmatprep.subr.mxu0 0.0
  %690 = vmatpush1.msra.mxu0 0.0
  %691 = vmatprep.subr.mxu0 0.0
  %692 = vmatpush1.msra.mxu0 0.0
  %693 = vmatprep.subr.mxu0 0.0
  %694 = vmatpush1.msra.mxu0 0.0
  %695 = vmatprep.subr.mxu0 0.0
  %696 = vmatpush1.msra.mxu0 0.0
  %697 = vmatprep.subr.mxu0 0.0
  %698 = vmatpush1.msra.mxu0 0.0
  %699 = vmatprep.subr.mxu0 0.0
  %700 = vmatpush1.msra.mxu0 0.0
  %701 = vmatprep.subr.mxu0 0.0
  %702 = vmatpush1.msra.mxu0 0.0
  %703 = vmatprep.subr.mxu0 0.0
  %704 = vmatpush1.msra.mxu0 0.0
  %705 = vmatprep.subr.mxu0 0.0
  %706 = vmatpush1.msra.mxu0 0.0
  %707 = vmatprep.subr.mxu0 0.0
  %708 = vmatpush1.msra.mxu0 0.0
  %709 = vmatprep.subr.mxu0 0.0
  %710 = vmatpush1.msra.mxu0 0.0
  %711 = vmatprep.subr.mxu0 0.0
  %712 = vmatpush1.msra.mxu0 0.0
  %713 = vmatprep.subr.mxu0 0.0
  %714 = vmatpush1.msra.mxu0 0.0
  %715 = vmatprep.subr.mxu0 0.0
  %716 = vmatpush1.msra.mxu0 0.0
  %717 = vmatprep.subr.mxu0 0.0
  %718 = vmatpush1.msra.mxu0 0.0
  %719 = vmatprep.subr.mxu0 0.0
  %720 = vmatpush1.msra.mxu0 0.0
  %721 = vmatprep.subr.mxu0 0.0
  %722 = vmatpush1.msra.mxu0 0.0
  %723 = vmatprep.subr.mxu0 0.0
  %724 = vmatpush1.msra.mxu0 0.0
  %725 = vmatprep.mubr.f32.mxu0 0.0
  %726 = vmatmul.mubr.f32.gmra.mrb[0].mxu0 %v659
  %v727 = vpop.f32.mrb[0].mxu0
  %v728 = vadd.f32 0.0, %v727
  %v729 = vpop.f32.mrb[0].mxu0
  %730 = vdwg.mxu0
  %v731 = vadd.f32 %v658, %v728
  %v732 = vxor.u32 %v731, 2147483648
  %v733 = vmul.f32 %v732, 1.442695
  %v734 = vpow.pop %v733
  %v735 = vadd.f32 %v734, 1.0
  %v736 = vrcp.pop %v735
  %v737 = vmul.f32 1.0, %v736
  %v738 = vtanh.pop %v731
  %v739 = vmul.f32 %v737, %v544
  %741 = vrot.lane.b32.xlu0 %v738, 64
  %v742 = vpop.permute.xlu0 %741
  %v744 = vmul.f32 %v737, %v742
  %746 = vrot.lane.b32.xlu0 %v744, 32
  %v747 = vpop.permute.xlu0 %746
  %v749 = vadd.f32 %v739, %v747
  %v750 = vtanh.pop %v749
  %752 = vrot.lane.b32.xlu0 %v750, 64
  %v753 = vpop.permute.xlu0 %752
  %v755 = vmul.f32 %v737, %v753
  %757 = vrot.lane.b32.xlu0 %v755, 32
  %v758 = vpop.permute.xlu0 %757
  %761 = vrot.lane.b32.xlu0 %v656, 64
  %v762 = vpop.permute.xlu0 %761
  %v764 = vsel %vm39, %v758, %v762
  %v766 = vsel %vm149, %v764, 0
  %768 = vmatprep.subr.mxu0 0.0
  %769 = vmatpush1.msra.mxu0 %v29
  %770 = vmatprep.subr.mxu0 0.0
  %771 = vmatpush1.msra.mxu0 %v30
  %772 = vmatprep.subr.mxu0 0.0
  %773 = vmatpush1.msra.mxu0 %v31
  %774 = vmatprep.subr.mxu0 0.0
  %775 = vmatpush1.msra.mxu0 %v32
  %776 = vmatprep.subr.mxu0 0.0
  %777 = vmatpush1.msra.mxu0 %v33
  %778 = vmatprep.subr.mxu0 0.0
  %779 = vmatpush1.msra.mxu0 %v34
  %780 = vmatprep.subr.mxu0 0.0
  %781 = vmatpush1.msra.mxu0 %v35
  %782 = vmatprep.subr.mxu0 0.0
  %783 = vmatpush1.msra.mxu0 %v36
  %784 = vmatprep.subr.mxu0 0.0
  %785 = vmatpush1.msra.mxu0 0.0
  %786 = vmatprep.subr.mxu0 0.0
  %787 = vmatpush1.msra.mxu0 0.0
  %788 = vmatprep.subr.mxu0 0.0
  %789 = vmatpush1.msra.mxu0 0.0
  %790 = vmatprep.subr.mxu0 0.0
  %791 = vmatpush1.msra.mxu0 0.0
  %792 = vmatprep.subr.mxu0 0.0
  %793 = vmatpush1.msra.mxu0 0.0
  %794 = vmatprep.subr.mxu0 0.0
  %795 = vmatpush1.msra.mxu0 0.0
  %796 = vmatprep.subr.mxu0 0.0
  %797 = vmatpush1.msra.mxu0 0.0
  %798 = vmatprep.subr.mxu0 0.0
  %799 = vmatpush1.msra.mxu0 0.0
  %800 = vmatprep.subr.mxu0 0.0
  %801 = vmatpush1.msra.mxu0 0.0
  %802 = vmatprep.subr.mxu0 0.0
  %803 = vmatpush1.msra.mxu0 0.0
  %804 = vmatprep.subr.mxu0 0.0
  %805 = vmatpush1.msra.mxu0 0.0
  %806 = vmatprep.subr.mxu0 0.0
  %807 = vmatpush1.msra.mxu0 0.0
  %808 = vmatprep.subr.mxu0 0.0
  %809 = vmatpush1.msra.mxu0 0.0
  %810 = vmatprep.subr.mxu0 0.0
  %811 = vmatpush1.msra.mxu0 0.0
  %812 = vmatprep.subr.mxu0 0.0
  %813 = vmatpush1.msra.mxu0 0.0
  %814 = vmatprep.subr.mxu0 0.0
  %815 = vmatpush1.msra.mxu0 0.0
  %816 = vmatprep.subr.mxu0 0.0
  %817 = vmatpush1.msra.mxu0 0.0
  %818 = vmatprep.subr.mxu0 0.0
  %819 = vmatpush1.msra.mxu0 0.0
  %820 = vmatprep.subr.mxu0 0.0
  %821 = vmatpush1.msra.mxu0 0.0
  %822 = vmatprep.subr.mxu0 0.0
  %823 = vmatpush1.msra.mxu0 0.0
  %824 = vmatprep.subr.mxu0 0.0
  %825 = vmatpush1.msra.mxu0 0.0
  %826 = vmatprep.subr.mxu0 0.0
  %827 = vmatpush1.msra.mxu0 0.0
  %828 = vmatprep.subr.mxu0 0.0
  %829 = vmatpush1.msra.mxu0 0.0
  %830 = vmatprep.subr.mxu0 0.0
  %831 = vmatpush1.msra.mxu0 0.0
  %832 = vmatprep.mubr.f32.mxu0 0.0
  %833 = vmatmul.mubr.f32.gmra.mrb[0].mxu0 %v766
  %v834 = vpop.f32.mrb[0].mxu0
  %v835 = vadd.f32 %v147, %v834
  %v836 = vpop.f32.mrb[0].mxu0
  %837 = vdwg.mxu0
  %v838 = vxor.u32 %v835, 2147483648
  %v839 = vmul.f32 %v838, 1.442695
  %v840 = vpow.pop %v839
  %v841 = vadd.f32 %v840, 1.0
  %v842 = vrcp.pop %v841
  %v843 = vmul.f32 1.0, %v842
  %v844 = vtanh.pop %v835
  %v845 = vmul.f32 %v843, %v650
  %847 = vrot.lane.b32.xlu0 %v844, 64
  %v848 = vpop.permute.xlu0 %847
  %v850 = vmul.f32 %v843, %v848
  %852 = vrot.lane.b32.xlu0 %v850, 32
  %v853 = vpop.permute.xlu0 %852
  %v855 = vadd.f32 %v845, %v853
  %v856 = vtanh.pop %v855
  %858 = vrot.lane.b32.xlu0 %v856, 64
  %v859 = vpop.permute.xlu0 %858
  %v861 = vmul.f32 %v843, %v859
  %s862 = scalar_lea.vmem %s0, 8
  %v863 = vld [vmem:[%s862] sm:$0x3]
  %v864 = vsel %vm39, %v758, 0
  %866 = vmatprep.subr.mxu0 0.0
  %867 = vmatpush1.msra.mxu0 %v25
  %868 = vmatprep.subr.mxu0 0.0
  %869 = vmatpush1.msra.mxu0 %v26
  %870 = vmatprep.subr.mxu0 0.0
  %871 = vmatpush1.msra.mxu0 %v27
  %872 = vmatprep.subr.mxu0 0.0
  %873 = vmatpush1.msra.mxu0 %v28
  %874 = vmatprep.subr.mxu0 0.0
  %875 = vmatpush1.msra.mxu0 0.0
  %876 = vmatprep.subr.mxu0 0.0
  %877 = vmatpush1.msra.mxu0 0.0
  %878 = vmatprep.subr.mxu0 0.0
  %879 = vmatpush1.msra.mxu0 0.0
  %880 = vmatprep.subr.mxu0 0.0
  %881 = vmatpush1.msra.mxu0 0.0
  %882 = vmatprep.subr.mxu0 0.0
  %883 = vmatpush1.msra.mxu0 0.0
  %884 = vmatprep.subr.mxu0 0.0
  %885 = vmatpush1.msra.mxu0 0.0
  %886 = vmatprep.subr.mxu0 0.0
  %887 = vmatpush1.msra.mxu0 0.0
  %888 = vmatprep.subr.mxu0 0.0
  %889 = vmatpush1.msra.mxu0 0.0
  %890 = vmatprep.subr.mxu0 0.0
  %891 = vmatpush1.msra.mxu0 0.0
  %892 = vmatprep.subr.mxu0 0.0
  %893 = vmatpush1.msra.mxu0 0.0
  %894 = vmatprep.subr.mxu0 0.0
  %895 = vmatpush1.msra.mxu0 0.0
  %896 = vmatprep.subr.mxu0 0.0
  %897 = vmatpush1.msra.mxu0 0.0
  %898 = vmatprep.subr.mxu0 0.0
  %899 = vmatpush1.msra.mxu0 0.0
  %900 = vmatprep.subr.mxu0 0.0
  %901 = vmatpush1.msra.mxu0 0.0
  %902 = vmatprep.subr.mxu0 0.0
  %903 = vmatpush1.msra.mxu0 0.0
  %904 = vmatprep.subr.mxu0 0.0
  %905 = vmatpush1.msra.mxu0 0.0
  %906 = vmatprep.subr.mxu0 0.0
  %907 = vmatpush1.msra.mxu0 0.0
  %908 = vmatprep.subr.mxu0 0.0
  %909 = vmatpush1.msra.mxu0 0.0
  %910 = vmatprep.subr.mxu0 0.0
  %911 = vmatpush1.msra.mxu0 0.0
  %912 = vmatprep.subr.mxu0 0.0
  %913 = vmatpush1.msra.mxu0 0.0
  %914 = vmatprep.subr.mxu0 0.0
  %915 = vmatpush1.msra.mxu0 0.0
  %916 = vmatprep.subr.mxu0 0.0
  %917 = vmatpush1.msra.mxu0 0.0
  %918 = vmatprep.subr.mxu0 0.0
  %919 = vmatpush1.msra.mxu0 0.0
  %920 = vmatprep.subr.mxu0 0.0
  %921 = vmatpush1.msra.mxu0 0.0
  %922 = vmatprep.subr.mxu0 0.0
  %923 = vmatpush1.msra.mxu0 0.0
  %924 = vmatprep.subr.mxu0 0.0
  %925 = vmatpush1.msra.mxu0 0.0
  %926 = vmatprep.subr.mxu0 0.0
  %927 = vmatpush1.msra.mxu0 0.0
  %928 = vmatprep.subr.mxu0 0.0
  %929 = vmatpush1.msra.mxu0 0.0
  %930 = vmatprep.mubr.f32.mxu0 0.0
  %931 = vmatmul.mubr.f32.gmra.mrb[0].mxu0 %v864
  %v932 = vpop.f32.mrb[0].mxu0
  %v933 = vadd.f32 0.0, %v932
  %v934 = vpop.f32.mrb[0].mxu0
  %935 = vdwg.mxu0
  %v936 = vadd.f32 %v863, %v933
  %v937 = vxor.u32 %v936, 2147483648
  %v938 = vmul.f32 %v937, 1.442695
  %v939 = vpow.pop %v938
  %v940 = vadd.f32 %v939, 1.0
  %v941 = vrcp.pop %v940
  %v942 = vmul.f32 1.0, %v941
  %v943 = vtanh.pop %v936
  %v944 = vmul.f32 %v942, %v749
  %946 = vrot.lane.b32.xlu0 %v943, 64
  %v947 = vpop.permute.xlu0 %946
  %v949 = vmul.f32 %v942, %v947
  %951 = vrot.lane.b32.xlu0 %v949, 32
  %v952 = vpop.permute.xlu0 %951
  %v954 = vadd.f32 %v944, %v952
  %v955 = vtanh.pop %v954
  %957 = vrot.lane.b32.xlu0 %v955, 64
  %v958 = vpop.permute.xlu0 %957
  %v960 = vmul.f32 %v942, %v958
  %962 = vrot.lane.b32.xlu0 %v960, 32
  %v963 = vpop.permute.xlu0 %962
  %966 = vrot.lane.b32.xlu0 %v861, 64
  %v967 = vpop.permute.xlu0 %966
  %v969 = vsel %vm39, %v963, %v967
  %v971 = vsel %vm149, %v969, 0
  %973 = vmatprep.subr.mxu0 0.0
  %974 = vmatpush1.msra.mxu0 %v29
  %975 = vmatprep.subr.mxu0 0.0
  %976 = vmatpush1.msra.mxu0 %v30
  %977 = vmatprep.subr.mxu0 0.0
  %978 = vmatpush1.msra.mxu0 %v31
  %979 = vmatprep.subr.mxu0 0.0
  %980 = vmatpush1.msra.mxu0 %v32
  %981 = vmatprep.subr.mxu0 0.0
  %982 = vmatpush1.msra.mxu0 %v33
  %983 = vmatprep.subr.mxu0 0.0
  %984 = vmatpush1.msra.mxu0 %v34
  %985 = vmatprep.subr.mxu0 0.0
  %986 = vmatpush1.msra.mxu0 %v35
  %987 = vmatprep.subr.mxu0 0.0
  %988 = vmatpush1.msra.mxu0 %v36
  %989 = vmatprep.subr.mxu0 0.0
  %990 = vmatpush1.msra.mxu0 0.0
  %991 = vmatprep.subr.mxu0 0.0
  %992 = vmatpush1.msra.mxu0 0.0
  %993 = vmatprep.subr.mxu0 0.0
  %994 = vmatpush1.msra.mxu0 0.0
  %995 = vmatprep.subr.mxu0 0.0
  %996 = vmatpush1.msra.mxu0 0.0
  %997 = vmatprep.subr.mxu0 0.0
  %998 = vmatpush1.msra.mxu0 0.0
  %999 = vmatprep.subr.mxu0 0.0
  %1000 = vmatpush1.msra.mxu0 0.0
  %1001 = vmatprep.subr.mxu0 0.0
  %1002 = vmatpush1.msra.mxu0 0.0
  %1003 = vmatprep.subr.mxu0 0.0
  %1004 = vmatpush1.msra.mxu0 0.0
  %1005 = vmatprep.subr.mxu0 0.0
  %1006 = vmatpush1.msra.mxu0 0.0
  %1007 = vmatprep.subr.mxu0 0.0
  %1008 = vmatpush1.msra.mxu0 0.0
  %1009 = vmatprep.subr.mxu0 0.0
  %1010 = vmatpush1.msra.mxu0 0.0
  %1011 = vmatprep.subr.mxu0 0.0
  %1012 = vmatpush1.msra.mxu0 0.0
  %1013 = vmatprep.subr.mxu0 0.0
  %1014 = vmatpush1.msra.mxu0 0.0
  %1015 = vmatprep.subr.mxu0 0.0
  %1016 = vmatpush1.msra.mxu0 0.0
  %1017 = vmatprep.subr.mxu0 0.0
  %1018 = vmatpush1.msra.mxu0 0.0
  %1019 = vmatprep.subr.mxu0 0.0
  %1020 = vmatpush1.msra.mxu0 0.0
  %1021 = vmatprep.subr.mxu0 0.0
  %1022 = vmatpush1.msra.mxu0 0.0
  %1023 = vmatprep.subr.mxu0 0.0
  %1024 = vmatpush1.msra.mxu0 0.0
  %1025 = vmatprep.subr.mxu0 0.0
  %1026 = vmatpush1.msra.mxu0 0.0
  %1027 = vmatprep.subr.mxu0 0.0
  %1028 = vmatpush1.msra.mxu0 0.0
  %1029 = vmatprep.subr.mxu0 0.0
  %1030 = vmatpush1.msra.mxu0 0.0
  %1031 = vmatprep.subr.mxu0 0.0
  %1032 = vmatpush1.msra.mxu0 0.0
  %1033 = vmatprep.subr.mxu0 0.0
  %1034 = vmatpush1.msra.mxu0 0.0
  %1035 = vmatprep.subr.mxu0 0.0
  %1036 = vmatpush1.msra.mxu0 0.0
  %1037 = vmatprep.mubr.f32.mxu0 0.0
  %1038 = vmatmul.mubr.f32.gmra.mrb[0].mxu0 %v971
  %v1039 = vpop.f32.mrb[0].mxu0
  %v1040 = vadd.f32 %v147, %v1039
  %v1041 = vpop.f32.mrb[0].mxu0
  %1042 = vdwg.mxu0
  %v1043 = vxor.u32 %v1040, 2147483648
  %v1044 = vmul.f32 %v1043, 1.442695
  %v1045 = vpow.pop %v1044
  %v1046 = vadd.f32 %v1045, 1.0
  %v1047 = vrcp.pop %v1046
  %v1048 = vmul.f32 1.0, %v1047
  %v1049 = vtanh.pop %v1040
  %v1050 = vmul.f32 %v1048, %v855
  %1052 = vrot.lane.b32.xlu0 %v1049, 64
  %v1053 = vpop.permute.xlu0 %1052
  %v1055 = vmul.f32 %v1048, %v1053
  %1057 = vrot.lane.b32.xlu0 %v1055, 32
  %v1058 = vpop.permute.xlu0 %1057
  %v1060 = vadd.f32 %v1050, %v1058
  %v1061 = vtanh.pop %v1060
  %1063 = vrot.lane.b32.xlu0 %v1061, 64
  %v1064 = vpop.permute.xlu0 %1063
  %v1066 = vmul.f32 %v1048, %v1064
  %s1067 = scalar_lea.vmem %s0, 10
  %v1068 = vld [vmem:[%s1067] sm:$0x3]
  %v1069 = vsel %vm39, %v963, 0
  %1071 = vmatprep.subr.mxu0 0.0
  %1072 = vmatpush1.msra.mxu0 %v25
  %1073 = vmatprep.subr.mxu0 0.0
  %1074 = vmatpush1.msra.mxu0 %v26
  %1075 = vmatprep.subr.mxu0 0.0
  %1076 = vmatpush1.msra.mxu0 %v27
  %1077 = vmatprep.subr.mxu0 0.0
  %1078 = vmatpush1.msra.mxu0 %v28
  %1079 = vmatprep.subr.mxu0 0.0
  %1080 = vmatpush1.msra.mxu0 0.0
  %1081 = vmatprep.subr.mxu0 0.0
  %1082 = vmatpush1.msra.mxu0 0.0
  %1083 = vmatprep.subr.mxu0 0.0
  %1084 = vmatpush1.msra.mxu0 0.0
  %1085 = vmatprep.subr.mxu0 0.0
  %1086 = vmatpush1.msra.mxu0 0.0
  %1087 = vmatprep.subr.mxu0 0.0
  %1088 = vmatpush1.msra.mxu0 0.0
  %1089 = vmatprep.subr.mxu0 0.0
  %1090 = vmatpush1.msra.mxu0 0.0
  %1091 = vmatprep.subr.mxu0 0.0
  %1092 = vmatpush1.msra.mxu0 0.0
  %1093 = vmatprep.subr.mxu0 0.0
  %1094 = vmatpush1.msra.mxu0 0.0
  %1095 = vmatprep.subr.mxu0 0.0
  %1096 = vmatpush1.msra.mxu0 0.0
  %1097 = vmatprep.subr.mxu0 0.0
  %1098 = vmatpush1.msra.mxu0 0.0
  %1099 = vmatprep.subr.mxu0 0.0
  %1100 = vmatpush1.msra.mxu0 0.0
  %1101 = vmatprep.subr.mxu0 0.0
  %1102 = vmatpush1.msra.mxu0 0.0
  %1103 = vmatprep.subr.mxu0 0.0
  %1104 = vmatpush1.msra.mxu0 0.0
  %1105 = vmatprep.subr.mxu0 0.0
  %1106 = vmatpush1.msra.mxu0 0.0
  %1107 = vmatprep.subr.mxu0 0.0
  %1108 = vmatpush1.msra.mxu0 0.0
  %1109 = vmatprep.subr.mxu0 0.0
  %1110 = vmatpush1.msra.mxu0 0.0
  %1111 = vmatprep.subr.mxu0 0.0
  %1112 = vmatpush1.msra.mxu0 0.0
  %1113 = vmatprep.subr.mxu0 0.0
  %1114 = vmatpush1.msra.mxu0 0.0
  %1115 = vmatprep.subr.mxu0 0.0
  %1116 = vmatpush1.msra.mxu0 0.0
  %1117 = vmatprep.subr.mxu0 0.0
  %1118 = vmatpush1.msra.mxu0 0.0
  %1119 = vmatprep.subr.mxu0 0.0
  %1120 = vmatpush1.msra.mxu0 0.0
  %1121 = vmatprep.subr.mxu0 0.0
  %1122 = vmatpush1.msra.mxu0 0.0
  %1123 = vmatprep.subr.mxu0 0.0
  %1124 = vmatpush1.msra.mxu0 0.0
  %1125 = vmatprep.subr.mxu0 0.0
  %1126 = vmatpush1.msra.mxu0 0.0
  %1127 = vmatprep.subr.mxu0 0.0
  %1128 = vmatpush1.msra.mxu0 0.0
  %1129 = vmatprep.subr.mxu0 0.0
  %1130 = vmatpush1.msra.mxu0 0.0
  %1131 = vmatprep.subr.mxu0 0.0
  %1132 = vmatpush1.msra.mxu0 0.0
  %1133 = vmatprep.subr.mxu0 0.0
  %1134 = vmatpush1.msra.mxu0 0.0
  %1135 = vmatprep.mubr.f32.mxu0 0.0
  %1136 = vmatmul.mubr.f32.gmra.mrb[0].mxu0 %v1069
  %v1137 = vpop.f32.mrb[0].mxu0
  %v1138 = vadd.f32 0.0, %v1137
  %v1139 = vpop.f32.mrb[0].mxu0
  %1140 = vdwg.mxu0
  %v1141 = vadd.f32 %v1068, %v1138
  %v1142 = vxor.u32 %v1141, 2147483648
  %v1143 = vmul.f32 %v1142, 1.442695
  %v1144 = vpow.pop %v1143
  %v1145 = vadd.f32 %v1144, 1.0
  %v1146 = vrcp.pop %v1145
  %v1147 = vmul.f32 1.0, %v1146
  %v1148 = vtanh.pop %v1141
  %v1149 = vmul.f32 %v1147, %v954
  %1151 = vrot.lane.b32.xlu0 %v1148, 64
  %v1152 = vpop.permute.xlu0 %1151
  %v1154 = vmul.f32 %v1147, %v1152
  %1156 = vrot.lane.b32.xlu0 %v1154, 32
  %v1157 = vpop.permute.xlu0 %1156
  %v1159 = vadd.f32 %v1149, %v1157
  %v1160 = vtanh.pop %v1159
  %1162 = vrot.lane.b32.xlu0 %v1160, 64
  %v1163 = vpop.permute.xlu0 %1162
  %v1165 = vmul.f32 %v1147, %v1163
  %1167 = vrot.lane.b32.xlu0 %v1165, 32
  %v1168 = vpop.permute.xlu0 %1167
  %1171 = vrot.lane.b32.xlu0 %v1066, 64
  %v1172 = vpop.permute.xlu0 %1171
  %v1174 = vsel %vm39, %v1168, %v1172
  %v1176 = vsel %vm149, %v1174, 0
  %1178 = vmatprep.subr.mxu0 0.0
  %1179 = vmatpush1.msra.mxu0 %v29
  %1180 = vmatprep.subr.mxu0 0.0
  %1181 = vmatpush1.msra.mxu0 %v30
  %1182 = vmatprep.subr.mxu0 0.0
  %1183 = vmatpush1.msra.mxu0 %v31
  %1184 = vmatprep.subr.mxu0 0.0
  %1185 = vmatpush1.msra.mxu0 %v32
  %1186 = vmatprep.subr.mxu0 0.0
  %1187 = vmatpush1.msra.mxu0 %v33
  %1188 = vmatprep.subr.mxu0 0.0
  %1189 = vmatpush1.msra.mxu0 %v34
  %1190 = vmatprep.subr.mxu0 0.0
  %1191 = vmatpush1.msra.mxu0 %v35
  %1192 = vmatprep.subr.mxu0 0.0
  %1193 = vmatpush1.msra.mxu0 %v36
  %1194 = vmatprep.subr.mxu0 0.0
  %1195 = vmatpush1.msra.mxu0 0.0
  %1196 = vmatprep.subr.mxu0 0.0
  %1197 = vmatpush1.msra.mxu0 0.0
  %1198 = vmatprep.subr.mxu0 0.0
  %1199 = vmatpush1.msra.mxu0 0.0
  %1200 = vmatprep.subr.mxu0 0.0
  %1201 = vmatpush1.msra.mxu0 0.0
  %1202 = vmatprep.subr.mxu0 0.0
  %1203 = vmatpush1.msra.mxu0 0.0
  %1204 = vmatprep.subr.mxu0 0.0
  %1205 = vmatpush1.msra.mxu0 0.0
  %1206 = vmatprep.subr.mxu0 0.0
  %1207 = vmatpush1.msra.mxu0 0.0
  %1208 = vmatprep.subr.mxu0 0.0
  %1209 = vmatpush1.msra.mxu0 0.0
  %1210 = vmatprep.subr.mxu0 0.0
  %1211 = vmatpush1.msra.mxu0 0.0
  %1212 = vmatprep.subr.mxu0 0.0
  %1213 = vmatpush1.msra.mxu0 0.0
  %1214 = vmatprep.subr.mxu0 0.0
  %1215 = vmatpush1.msra.mxu0 0.0
  %1216 = vmatprep.subr.mxu0 0.0
  %1217 = vmatpush1.msra.mxu0 0.0
  %1218 = vmatprep.subr.mxu0 0.0
  %1219 = vmatpush1.msra.mxu0 0.0
  %1220 = vmatprep.subr.mxu0 0.0
  %1221 = vmatpush1.msra.mxu0 0.0
  %1222 = vmatprep.subr.mxu0 0.0
  %1223 = vmatpush1.msra.mxu0 0.0
  %1224 = vmatprep.subr.mxu0 0.0
  %1225 = vmatpush1.msra.mxu0 0.0
  %1226 = vmatprep.subr.mxu0 0.0
  %1227 = vmatpush1.msra.mxu0 0.0
  %1228 = vmatprep.subr.mxu0 0.0
  %1229 = vmatpush1.msra.mxu0 0.0
  %1230 = vmatprep.subr.mxu0 0.0
  %1231 = vmatpush1.msra.mxu0 0.0
  %1232 = vmatprep.subr.mxu0 0.0
  %1233 = vmatpush1.msra.mxu0 0.0
  %1234 = vmatprep.subr.mxu0 0.0
  %1235 = vmatpush1.msra.mxu0 0.0
  %1236 = vmatprep.subr.mxu0 0.0
  %1237 = vmatpush1.msra.mxu0 0.0
  %1238 = vmatprep.subr.mxu0 0.0
  %1239 = vmatpush1.msra.mxu0 0.0
  %1240 = vmatprep.subr.mxu0 0.0
  %1241 = vmatpush1.msra.mxu0 0.0
  %1242 = vmatprep.mubr.f32.mxu0 0.0
  %1243 = vmatmul.mubr.f32.gmra.mrb[0].mxu0 %v1176
  %v1244 = vpop.f32.mrb[0].mxu0
  %v1245 = vadd.f32 %v147, %v1244
  %v1246 = vpop.f32.mrb[0].mxu0
  %1247 = vdwg.mxu0
  %v1248 = vxor.u32 %v1245, 2147483648
  %v1249 = vmul.f32 %v1248, 1.442695
  %v1250 = vpow.pop %v1249
  %v1251 = vadd.f32 %v1250, 1.0
  %v1252 = vrcp.pop %v1251
  %v1253 = vmul.f32 1.0, %v1252
  %v1254 = vtanh.pop %v1245
  %v1255 = vmul.f32 %v1253, %v1060
  %1257 = vrot.lane.b32.xlu0 %v1254, 64
  %v1258 = vpop.permute.xlu0 %1257
  %v1260 = vmul.f32 %v1253, %v1258
  %1262 = vrot.lane.b32.xlu0 %v1260, 32
  %v1263 = vpop.permute.xlu0 %1262
  %v1265 = vadd.f32 %v1255, %v1263
  %v1266 = vtanh.pop %v1265
  %1268 = vrot.lane.b32.xlu0 %v1266, 64
  %v1269 = vpop.permute.xlu0 %1268
  %v1271 = vmul.f32 %v1253, %v1269
  %s1272 = scalar_lea.vmem %s0, 12
  %v1273 = vld [vmem:[%s1272] sm:$0x3]
  %v1274 = vsel %vm39, %v1168, 0
  %1276 = vmatprep.subr.mxu0 0.0
  %1277 = vmatpush1.msra.mxu0 %v25
  %1278 = vmatprep.subr.mxu0 0.0
  %1279 = vmatpush1.msra.mxu0 %v26
  %1280 = vmatprep.subr.mxu0 0.0
  %1281 = vmatpush1.msra.mxu0 %v27
  %1282 = vmatprep.subr.mxu0 0.0
  %1283 = vmatpush1.msra.mxu0 %v28
  %1284 = vmatprep.subr.mxu0 0.0
  %1285 = vmatpush1.msra.mxu0 0.0
  %1286 = vmatprep.subr.mxu0 0.0
  %1287 = vmatpush1.msra.mxu0 0.0
  %1288 = vmatprep.subr.mxu0 0.0
  %1289 = vmatpush1.msra.mxu0 0.0
  %1290 = vmatprep.subr.mxu0 0.0
  %1291 = vmatpush1.msra.mxu0 0.0
  %1292 = vmatprep.subr.mxu0 0.0
  %1293 = vmatpush1.msra.mxu0 0.0
  %1294 = vmatprep.subr.mxu0 0.0
  %1295 = vmatpush1.msra.mxu0 0.0
  %1296 = vmatprep.subr.mxu0 0.0
  %1297 = vmatpush1.msra.mxu0 0.0
  %1298 = vmatprep.subr.mxu0 0.0
  %1299 = vmatpush1.msra.mxu0 0.0
  %1300 = vmatprep.subr.mxu0 0.0
  %1301 = vmatpush1.msra.mxu0 0.0
  %1302 = vmatprep.subr.mxu0 0.0
  %1303 = vmatpush1.msra.mxu0 0.0
  %1304 = vmatprep.subr.mxu0 0.0
  %1305 = vmatpush1.msra.mxu0 0.0
  %1306 = vmatprep.subr.mxu0 0.0
  %1307 = vmatpush1.msra.mxu0 0.0
  %1308 = vmatprep.subr.mxu0 0.0
  %1309 = vmatpush1.msra.mxu0 0.0
  %1310 = vmatprep.subr.mxu0 0.0
  %1311 = vmatpush1.msra.mxu0 0.0
  %1312 = vmatprep.subr.mxu0 0.0
  %1313 = vmatpush1.msra.mxu0 0.0
  %1314 = vmatprep.subr.mxu0 0.0
  %1315 = vmatpush1.msra.mxu0 0.0
  %1316 = vmatprep.subr.mxu0 0.0
  %1317 = vmatpush1.msra.mxu0 0.0
  %1318 = vmatprep.subr.mxu0 0.0
  %1319 = vmatpush1.msra.mxu0 0.0
  %1320 = vmatprep.subr.mxu0 0.0
  %1321 = vmatpush1.msra.mxu0 0.0
  %1322 = vmatprep.subr.mxu0 0.0
  %1323 = vmatpush1.msra.mxu0 0.0
  %1324 = vmatprep.subr.mxu0 0.0
  %1325 = vmatpush1.msra.mxu0 0.0
  %1326 = vmatprep.subr.mxu0 0.0
  %1327 = vmatpush1.msra.mxu0 0.0
  %1328 = vmatprep.subr.mxu0 0.0
  %1329 = vmatpush1.msra.mxu0 0.0
  %1330 = vmatprep.subr.mxu0 0.0
  %1331 = vmatpush1.msra.mxu0 0.0
  %1332 = vmatprep.subr.mxu0 0.0
  %1333 = vmatpush1.msra.mxu0 0.0
  %1334 = vmatprep.subr.mxu0 0.0
  %1335 = vmatpush1.msra.mxu0 0.0
  %1336 = vmatprep.subr.mxu0 0.0
  %1337 = vmatpush1.msra.mxu0 0.0
  %1338 = vmatprep.subr.mxu0 0.0
  %1339 = vmatpush1.msra.mxu0 0.0
  %1340 = vmatprep.mubr.f32.mxu0 0.0
  %1341 = vmatmul.mubr.f32.gmra.mrb[0].mxu0 %v1274
  %v1342 = vpop.f32.mrb[0].mxu0
  %v1343 = vadd.f32 0.0, %v1342
  %v1344 = vpop.f32.mrb[0].mxu0
  %1345 = vdwg.mxu0
  %v1346 = vadd.f32 %v1273, %v1343
  %v1347 = vxor.u32 %v1346, 2147483648
  %v1348 = vmul.f32 %v1347, 1.442695
  %v1349 = vpow.pop %v1348
  %v1350 = vadd.f32 %v1349, 1.0
  %v1351 = vrcp.pop %v1350
  %v1352 = vmul.f32 1.0, %v1351
  %v1353 = vtanh.pop %v1346
  %v1354 = vmul.f32 %v1352, %v1159
  %1356 = vrot.lane.b32.xlu0 %v1353, 64
  %v1357 = vpop.permute.xlu0 %1356
  %v1359 = vmul.f32 %v1352, %v1357
  %1361 = vrot.lane.b32.xlu0 %v1359, 32
  %v1362 = vpop.permute.xlu0 %1361
  %v1364 = vadd.f32 %v1354, %v1362
  %v1365 = vtanh.pop %v1364
  %1367 = vrot.lane.b32.xlu0 %v1365, 64
  %v1368 = vpop.permute.xlu0 %1367
  %v1370 = vmul.f32 %v1352, %v1368
  %1372 = vrot.lane.b32.xlu0 %v1370, 32
  %v1373 = vpop.permute.xlu0 %1372
  %1376 = vrot.lane.b32.xlu0 %v1271, 64
  %v1377 = vpop.permute.xlu0 %1376
  %v1379 = vsel %vm39, %v1373, %v1377
  %v1381 = vsel %vm149, %v1379, 0
  %1383 = vmatprep.subr.mxu0 0.0
  %1384 = vmatpush1.msra.mxu0 %v29
  %1385 = vmatprep.subr.mxu0 0.0
  %1386 = vmatpush1.msra.mxu0 %v30
  %1387 = vmatprep.subr.mxu0 0.0
  %1388 = vmatpush1.msra.mxu0 %v31
  %1389 = vmatprep.subr.mxu0 0.0
  %1390 = vmatpush1.msra.mxu0 %v32
  %1391 = vmatprep.subr.mxu0 0.0
  %1392 = vmatpush1.msra.mxu0 %v33
  %1393 = vmatprep.subr.mxu0 0.0
  %1394 = vmatpush1.msra.mxu0 %v34
  %1395 = vmatprep.subr.mxu0 0.0
  %1396 = vmatpush1.msra.mxu0 %v35
  %1397 = vmatprep.subr.mxu0 0.0
  %1398 = vmatpush1.msra.mxu0 %v36
  %1399 = vmatprep.subr.mxu0 0.0
  %1400 = vmatpush1.msra.mxu0 0.0
  %1401 = vmatprep.subr.mxu0 0.0
  %1402 = vmatpush1.msra.mxu0 0.0
  %1403 = vmatprep.subr.mxu0 0.0
  %1404 = vmatpush1.msra.mxu0 0.0
  %1405 = vmatprep.subr.mxu0 0.0
  %1406 = vmatpush1.msra.mxu0 0.0
  %1407 = vmatprep.subr.mxu0 0.0
  %1408 = vmatpush1.msra.mxu0 0.0
  %1409 = vmatprep.subr.mxu0 0.0
  %1410 = vmatpush1.msra.mxu0 0.0
  %1411 = vmatprep.subr.mxu0 0.0
  %1412 = vmatpush1.msra.mxu0 0.0
  %1413 = vmatprep.subr.mxu0 0.0
  %1414 = vmatpush1.msra.mxu0 0.0
  %1415 = vmatprep.subr.mxu0 0.0
  %1416 = vmatpush1.msra.mxu0 0.0
  %1417 = vmatprep.subr.mxu0 0.0
  %1418 = vmatpush1.msra.mxu0 0.0
  %1419 = vmatprep.subr.mxu0 0.0
  %1420 = vmatpush1.msra.mxu0 0.0
  %1421 = vmatprep.subr.mxu0 0.0
  %1422 = vmatpush1.msra.mxu0 0.0
  %1423 = vmatprep.subr.mxu0 0.0
  %1424 = vmatpush1.msra.mxu0 0.0
  %1425 = vmatprep.subr.mxu0 0.0
  %1426 = vmatpush1.msra.mxu0 0.0
  %1427 = vmatprep.subr.mxu0 0.0
  %1428 = vmatpush1.msra.mxu0 0.0
  %1429 = vmatprep.subr.mxu0 0.0
  %1430 = vmatpush1.msra.mxu0 0.0
  %1431 = vmatprep.subr.mxu0 0.0
  %1432 = vmatpush1.msra.mxu0 0.0
  %1433 = vmatprep.subr.mxu0 0.0
  %1434 = vmatpush1.msra.mxu0 0.0
  %1435 = vmatprep.subr.mxu0 0.0
  %1436 = vmatpush1.msra.mxu0 0.0
  %1437 = vmatprep.subr.mxu0 0.0
  %1438 = vmatpush1.msra.mxu0 0.0
  %1439 = vmatprep.subr.mxu0 0.0
  %1440 = vmatpush1.msra.mxu0 0.0
  %1441 = vmatprep.subr.mxu0 0.0
  %1442 = vmatpush1.msra.mxu0 0.0
  %1443 = vmatprep.subr.mxu0 0.0
  %1444 = vmatpush1.msra.mxu0 0.0
  %1445 = vmatprep.subr.mxu0 0.0
  %1446 = vmatpush1.msra.mxu0 0.0
  %1447 = vmatprep.mubr.f32.mxu0 0.0
  %1448 = vmatmul.mubr.f32.gmra.mrb[0].mxu0 %v1381
  %v1449 = vpop.f32.mrb[0].mxu0
  %v1450 = vadd.f32 %v147, %v1449
  %v1451 = vpop.f32.mrb[0].mxu0
  %1452 = vdwg.mxu0
  %v1453 = vxor.u32 %v1450, 2147483648
  %v1454 = vmul.f32 %v1453, 1.442695
  %v1455 = vpow.pop %v1454
  %v1456 = vadd.f32 %v1455, 1.0
  %v1457 = vrcp.pop %v1456
  %v1458 = vmul.f32 1.0, %v1457
  %v1459 = vtanh.pop %v1450
  %v1460 = vmul.f32 %v1458, %v1265
  %1462 = vrot.lane.b32.xlu0 %v1459, 64
  %v1463 = vpop.permute.xlu0 %1462
  %v1465 = vmul.f32 %v1458, %v1463
  %1467 = vrot.lane.b32.xlu0 %v1465, 32
  %v1468 = vpop.permute.xlu0 %1467
  %v1470 = vadd.f32 %v1460, %v1468
  %v1471 = vtanh.pop %v1470
  %1473 = vrot.lane.b32.xlu0 %v1471, 64
  %v1474 = vpop.permute.xlu0 %1473
  %v1476 = vmul.f32 %v1458, %v1474
  %s1477 = scalar_lea.vmem %s0, 14
  %v1478 = vld [vmem:[%s1477] sm:$0x3]
  %v1479 = vsel %vm39, %v1373, 0
  %1481 = vmatprep.subr.mxu0 0.0
  %1482 = vmatpush1.msra.mxu0 %v25
  %1483 = vmatprep.subr.mxu0 0.0
  %1484 = vmatpush1.msra.mxu0 %v26
  %1485 = vmatprep.subr.mxu0 0.0
  %1486 = vmatpush1.msra.mxu0 %v27
  %1487 = vmatprep.subr.mxu0 0.0
  %1488 = vmatpush1.msra.mxu0 %v28
  %1489 = vmatprep.subr.mxu0 0.0
  %1490 = vmatpush1.msra.mxu0 0.0
  %1491 = vmatprep.subr.mxu0 0.0
  %1492 = vmatpush1.msra.mxu0 0.0
  %1493 = vmatprep.subr.mxu0 0.0
  %1494 = vmatpush1.msra.mxu0 0.0
  %1495 = vmatprep.subr.mxu0 0.0
  %1496 = vmatpush1.msra.mxu0 0.0
  %1497 = vmatprep.subr.mxu0 0.0
  %1498 = vmatpush1.msra.mxu0 0.0
  %1499 = vmatprep.subr.mxu0 0.0
  %1500 = vmatpush1.msra.mxu0 0.0
  %1501 = vmatprep.subr.mxu0 0.0
  %1502 = vmatpush1.msra.mxu0 0.0
  %1503 = vmatprep.subr.mxu0 0.0
  %1504 = vmatpush1.msra.mxu0 0.0
  %1505 = vmatprep.subr.mxu0 0.0
  %1506 = vmatpush1.msra.mxu0 0.0
  %1507 = vmatprep.subr.mxu0 0.0
  %1508 = vmatpush1.msra.mxu0 0.0
  %1509 = vmatprep.subr.mxu0 0.0
  %1510 = vmatpush1.msra.mxu0 0.0
  %1511 = vmatprep.subr.mxu0 0.0
  %1512 = vmatpush1.msra.mxu0 0.0
  %1513 = vmatprep.subr.mxu0 0.0
  %1514 = vmatpush1.msra.mxu0 0.0
  %1515 = vmatprep.subr.mxu0 0.0
  %1516 = vmatpush1.msra.mxu0 0.0
  %1517 = vmatprep.subr.mxu0 0.0
  %1518 = vmatpush1.msra.mxu0 0.0
  %1519 = vmatprep.subr.mxu0 0.0
  %1520 = vmatpush1.msra.mxu0 0.0
  %1521 = vmatprep.subr.mxu0 0.0
  %1522 = vmatpush1.msra.mxu0 0.0
  %1523 = vmatprep.subr.mxu0 0.0
  %1524 = vmatpush1.msra.mxu0 0.0
  %1525 = vmatprep.subr.mxu0 0.0
  %1526 = vmatpush1.msra.mxu0 0.0
  %1527 = vmatprep.subr.mxu0 0.0
  %1528 = vmatpush1.msra.mxu0 0.0
  %1529 = vmatprep.subr.mxu0 0.0
  %1530 = vmatpush1.msra.mxu0 0.0
  %1531 = vmatprep.subr.mxu0 0.0
  %1532 = vmatpush1.msra.mxu0 0.0
  %1533 = vmatprep.subr.mxu0 0.0
  %1534 = vmatpush1.msra.mxu0 0.0
  %1535 = vmatprep.subr.mxu0 0.0
  %1536 = vmatpush1.msra.mxu0 0.0
  %1537 = vmatprep.subr.mxu0 0.0
  %1538 = vmatpush1.msra.mxu0 0.0
  %1539 = vmatprep.subr.mxu0 0.0
  %1540 = vmatpush1.msra.mxu0 0.0
  %1541 = vmatprep.subr.mxu0 0.0
  %1542 = vmatpush1.msra.mxu0 0.0
  %1543 = vmatprep.subr.mxu0 0.0
  %1544 = vmatpush1.msra.mxu0 0.0
  %1545 = vmatprep.mubr.f32.mxu0 0.0
  %1546 = vmatmul.mubr.f32.gmra.mrb[0].mxu0 %v1479
  %v1547 = vpop.f32.mrb[0].mxu0
  %v1548 = vadd.f32 0.0, %v1547
  %v1549 = vpop.f32.mrb[0].mxu0
  %1550 = vdwg.mxu0
  %v1551 = vadd.f32 %v1478, %v1548
  %v1552 = vxor.u32 %v1551, 2147483648
  %v1553 = vmul.f32 %v1552, 1.442695
  %v1554 = vpow.pop %v1553
  %v1555 = vadd.f32 %v1554, 1.0
  %v1556 = vrcp.pop %v1555
  %v1557 = vmul.f32 1.0, %v1556
  %v1558 = vtanh.pop %v1551
  %v1559 = vmul.f32 %v1557, %v1364
  %1561 = vrot.lane.b32.xlu0 %v1558, 64
  %v1562 = vpop.permute.xlu0 %1561
  %v1564 = vmul.f32 %v1557, %v1562
  %1566 = vrot.lane.b32.xlu0 %v1564, 32
  %v1567 = vpop.permute.xlu0 %1566
  %v1569 = vadd.f32 %v1559, %v1567
  %v1570 = vtanh.pop %v1569
  %1572 = vrot.lane.b32.xlu0 %v1570, 64
  %v1573 = vpop.permute.xlu0 %1572
  %v1575 = vmul.f32 %v1557, %v1573
  %1577 = vrot.lane.b32.xlu0 %v1575, 32
  %v1578 = vpop.permute.xlu0 %1577
  %1581 = vrot.lane.b32.xlu0 %v1476, 64
  %v1582 = vpop.permute.xlu0 %1581
  %v1584 = vsel %vm39, %v1578, %v1582
  %v1586 = vsel %vm149, %v1584, 0
  %1588 = vmatprep.subr.mxu0 0.0
  %1589 = vmatpush1.msra.mxu0 %v29
  %1590 = vmatprep.subr.mxu0 0.0
  %1591 = vmatpush1.msra.mxu0 %v30
  %1592 = vmatprep.subr.mxu0 0.0
  %1593 = vmatpush1.msra.mxu0 %v31
  %1594 = vmatprep.subr.mxu0 0.0
  %1595 = vmatpush1.msra.mxu0 %v32
  %1596 = vmatprep.subr.mxu0 0.0
  %1597 = vmatpush1.msra.mxu0 %v33
  %1598 = vmatprep.subr.mxu0 0.0
  %1599 = vmatpush1.msra.mxu0 %v34
  %1600 = vmatprep.subr.mxu0 0.0
  %1601 = vmatpush1.msra.mxu0 %v35
  %1602 = vmatprep.subr.mxu0 0.0
  %1603 = vmatpush1.msra.mxu0 %v36
  %1604 = vmatprep.subr.mxu0 0.0
  %1605 = vmatpush1.msra.mxu0 0.0
  %1606 = vmatprep.subr.mxu0 0.0
  %1607 = vmatpush1.msra.mxu0 0.0
  %1608 = vmatprep.subr.mxu0 0.0
  %1609 = vmatpush1.msra.mxu0 0.0
  %1610 = vmatprep.subr.mxu0 0.0
  %1611 = vmatpush1.msra.mxu0 0.0
  %1612 = vmatprep.subr.mxu0 0.0
  %1613 = vmatpush1.msra.mxu0 0.0
  %1614 = vmatprep.subr.mxu0 0.0
  %1615 = vmatpush1.msra.mxu0 0.0
  %1616 = vmatprep.subr.mxu0 0.0
  %1617 = vmatpush1.msra.mxu0 0.0
  %1618 = vmatprep.subr.mxu0 0.0
  %1619 = vmatpush1.msra.mxu0 0.0
  %1620 = vmatprep.subr.mxu0 0.0
  %1621 = vmatpush1.msra.mxu0 0.0
  %1622 = vmatprep.subr.mxu0 0.0
  %1623 = vmatpush1.msra.mxu0 0.0
  %1624 = vmatprep.subr.mxu0 0.0
  %1625 = vmatpush1.msra.mxu0 0.0
  %1626 = vmatprep.subr.mxu0 0.0
  %1627 = vmatpush1.msra.mxu0 0.0
  %1628 = vmatprep.subr.mxu0 0.0
  %1629 = vmatpush1.msra.mxu0 0.0
  %1630 = vmatprep.subr.mxu0 0.0
  %1631 = vmatpush1.msra.mxu0 0.0
  %1632 = vmatprep.subr.mxu0 0.0
  %1633 = vmatpush1.msra.mxu0 0.0
  %1634 = vmatprep.subr.mxu0 0.0
  %1635 = vmatpush1.msra.mxu0 0.0
  %1636 = vmatprep.subr.mxu0 0.0
  %1637 = vmatpush1.msra.mxu0 0.0
  %1638 = vmatprep.subr.mxu0 0.0
  %1639 = vmatpush1.msra.mxu0 0.0
  %1640 = vmatprep.subr.mxu0 0.0
  %1641 = vmatpush1.msra.mxu0 0.0
  %1642 = vmatprep.subr.mxu0 0.0
  %1643 = vmatpush1.msra.mxu0 0.0
  %1644 = vmatprep.subr.mxu0 0.0
  %1645 = vmatpush1.msra.mxu0 0.0
  %1646 = vmatprep.subr.mxu0 0.0
  %1647 = vmatpush1.msra.mxu0 0.0
  %1648 = vmatprep.subr.mxu0 0.0
  %1649 = vmatpush1.msra.mxu0 0.0
  %1650 = vmatprep.subr.mxu0 0.0
  %1651 = vmatpush1.msra.mxu0 0.0
  %1652 = vmatprep.mubr.f32.mxu0 0.0
  %1653 = vmatmul.mubr.f32.gmra.mrb[0].mxu0 %v1586
  %v1654 = vpop.f32.mrb[0].mxu0
  %v1655 = vadd.f32 %v147, %v1654
  %v1656 = vpop.f32.mrb[0].mxu0
  %1657 = vdwg.mxu0
  %v1658 = vxor.u32 %v1655, 2147483648
  %v1659 = vmul.f32 %v1658, 1.442695
  %v1660 = vpow.pop %v1659
  %v1661 = vadd.f32 %v1660, 1.0
  %v1662 = vrcp.pop %v1661
  %v1663 = vmul.f32 1.0, %v1662
  %v1664 = vtanh.pop %v1655
  %v1665 = vmul.f32 %v1663, %v1470
  %1667 = vrot.lane.b32.xlu0 %v1664, 64
  %v1668 = vpop.permute.xlu0 %1667
  %v1670 = vmul.f32 %v1663, %v1668
  %1672 = vrot.lane.b32.xlu0 %v1670, 32
  %v1673 = vpop.permute.xlu0 %1672
  %v1675 = vadd.f32 %v1665, %v1673
  %v1676 = vtanh.pop %v1675
  %1678 = vrot.lane.b32.xlu0 %v1676, 64
  %v1679 = vpop.permute.xlu0 %1678
  %v1681 = vmul.f32 %v1663, %v1679
  %v1682 = vld [vmem:[%s4] sm:$0x1]
  %v1684 = vlaneseq
  %v1685 = vshrl.u32 %v1684, 7
  %v1686 = vsub.s32 0, %v1685
  %v1687 = vrot.slane %v1682, %v1686
  %1688 = vrot.lane.b32.xlu0 %v1687, 96
  %v1689 = vpop.permute.xlu0 %1688
  %v1691 = vmul.f32 %v1681, %v1689
  %1693 = vrot.lane.b32.xlu0 %v1691, 32
  %v1694 = vpop.permute.xlu0 %1693
  %vm1696 = vcmask 254976
  %v1697 = vsel %vm1696, %v1694, 0.0
  %1698 = vadd.xlane.f32.xlu0 %v1697
  %v1699 = vpop.xlane.xlu0 %1698
  %v1700 = vld [vmem:[#allocation2] sm:$0x1]
  %v1702 = vlaneseq
  %v1703 = vshrl.u32 %v1702, 7
  %v1704 = vsub.s32 0, %v1703
  %v1705 = vrot.slane %v1700, %v1704
  %v1707 = vadd.f32 %v1699, %v1705
  %vm1708 = vcmask 1024
  %1709 = vst.msk [vmem:[%s6] sm:$0x3] %vm1708, %v1707
  // Predicated region
  $region26: #{rnn_model_forward.1} parent=0 // pred_check
    _
  $region27: #{rnn_model_forward.1} parent=0 // pred_check_branch
    %1711 = sbr.rel (0) target = $region29
  $region28: #{rnn_model_forward.1} parent=0 // pred_region
    _
  $region29: #{rnn_model_forward.1} parent=0 // pred_fallthru
    _
  // Predicated region
  $region30: #{rnn_model_forward.1} parent=0 // pred_check
    _
  $region31: #{rnn_model_forward.1} parent=0 // pred_check_branch
    %1713 = sbr.rel (0) target = $region33
  $region32: #{rnn_model_forward.1} parent=0 // pred_region
    _
  $region33: #{rnn_model_forward.1} parent=0 // pred_fallthru
    _

</llo_original>
